<compile_context>
chip_gen: v7x
topology: tpu7x:2x2x1
jax: 0.10.0
libtpu: 0.0.40
codegen_flags: <defaults>
</compile_context>

<pallas_src>
import jax
import jax.numpy as jnp
from jax.experimental import pallas as pl
from jax.experimental.pallas import tpu as pltpu


def _fused_kernel(se_ref, w1_ref, b1_ref, x_ref, w2_ref, g_ref, beta_ref, out_ref):
    # se_ref  : [C_se, 1]   squeeze vector (x145 as a column), resident
    # w1_ref  : [C, C_se]   conv2d47 weight, PyTorch-native (Cout, Cin), resident
    # b1_ref  : [C, 1]      conv2d47 bias (column), resident
    # x_ref   : [C, P]      x143 flattened NCHW -> (channels, pixels), resident
    # w2_ref  : [CT, C]     conv2d48 weight tile (Cout tile, Cin), PyTorch-native
    # g_ref   : [CT, 1]     batchnorm gamma tile (column)
    # beta_ref: [CT, 1]     batchnorm beta tile  (column)
    # out_ref : [CT, P]

    # SE gate: relu -> 1x1 conv (tiny matmul) -> bias -> sigmoid, produced
    # directly as a [C, 1] column so no transpose is needed downstream.
    se = jnp.maximum(se_ref[...], 0.0)                                 # [C_se, 1]
    gate = jax.nn.sigmoid(
        jnp.dot(w1_ref[...], se, preferred_element_type=jnp.float32)
        + b1_ref[...])                                                 # [C, 1]

    # Gate the activation (C x P), not the C x C weight, then one MXU matmul:
    #   z[co, p] = sum_ci w2[co, ci] * (gate[ci] * x[ci, p])
    x_gated = x_ref[...] * gate                                        # [C, P]
    z = jnp.dot(w2_ref[...], x_gated,
                preferred_element_type=jnp.float32)                    # [CT, P]

    # BatchNorm2d (training-mode batch stats) over the pixel (lane) axis:
    # one-pass sums folded into a single per-channel scale/bias epilogue.
    inv_p = 1.0 / z.shape[1]
    s1 = jnp.sum(z, axis=1, keepdims=True)                             # [CT, 1]
    s2 = jnp.sum(z * z, axis=1, keepdims=True)                         # [CT, 1]
    mean = s1 * inv_p
    var = jnp.maximum(s2 * inv_p - mean * mean, 0.0)   # clamp: cancellation guard
    inv_std = jax.lax.rsqrt(var + 1e-5)
    scale = g_ref[...] * inv_std                                       # [CT, 1]
    bias = beta_ref[...] - mean * scale                                # [CT, 1]
    out_ref[...] = z * scale + bias                                    # [CT, P]


def fused_forward(x145, x143, w1, b1, w2, gamma, beta):
    """x145: [N, C_se, 1, 1]  x143: [N, C, H, W]  -> [N, C, H, W]

    w1 is PyTorch-native (Cout, Cin) = (336, 30); w2 is (Cout, Cin) = (336, 336).
    """
    N, C_se, _, _ = x145.shape
    _, C, H, W = x143.shape
    # The SE gate is per-sample and BN stats pool over N*H*W; this fused
    # kernel assumes the module's actual batch size of 1.
    assert N == 1, "fused kernel assumes N == 1 (per-sample SE gate)"
    assert C % 16 == 0, "Cout tiling assumes C divisible by 16"
    P = H * W

    CT = C // 2                 # Cout tile: 2-wide parallel grid (v7x: 2 TCs)
    grid = (C // CT,)

    se_col = x145.reshape(C_se, 1)       # contiguous -> free reshape
    x_cp = x143.reshape(C, P)            # NCHW, N=1 -> (C, H*W): free reshape

    out_cp = pl.pallas_call(
        _fused_kernel,
        out_shape=jax.ShapeDtypeStruct((C, P), jnp.float32),
        grid=grid,
        in_specs=[
            pl.BlockSpec((C_se, 1), lambda i: (0, 0)),    # se    (resident)
            pl.BlockSpec((C, C_se), lambda i: (0, 0)),    # w1    (resident)
            pl.BlockSpec((C, 1), lambda i: (0, 0)),       # b1    (resident)
            pl.BlockSpec((C, P), lambda i: (0, 0)),       # x     (resident)
            pl.BlockSpec((CT, C), lambda i: (i, 0)),      # w2    tile over Cout
            pl.BlockSpec((CT, 1), lambda i: (i, 0)),      # gamma tile over Cout
            pl.BlockSpec((CT, 1), lambda i: (i, 0)),      # beta  tile over Cout
        ],
        out_specs=pl.BlockSpec((CT, P), lambda i: (i, 0)),
        compiler_params=pltpu.CompilerParams(
            dimension_semantics=("parallel",)),
    )(se_col, w1, b1.reshape(C, 1), x_cp, w2,
      gamma.reshape(C, 1), beta.reshape(C, 1))

    return out_cp.reshape(N, C, H, W)    # free reshape back to NCHW


def reference_forward(x145, x143, w1, b1, w2, gamma, beta):
    """Pure-JAX reference matching PyTorch training-mode forward."""
    N, C_se, _, _ = x145.shape
    _, C, H, W = x143.shape
    se = jnp.maximum(x145.reshape(N, C_se), 0.0)
    gate = jax.nn.sigmoid(se @ w1.T + b1[None, :])       # w1 is (Cout, Cin)
    y = x143 * gate[:, :, None, None]                    # [N, C, H, W]
    y2 = jnp.transpose(y, (0, 2, 3, 1)).reshape(-1, C)
    z = y2 @ w2.T                                        # w2 is (Cout, Cin)
    mean = jnp.mean(z, axis=0)
    var = jnp.mean((z - mean) ** 2, axis=0)
    zn = gamma * (z - mean) / jnp.sqrt(var + 1e-5) + beta
    return jnp.transpose(zn.reshape(N, H, W, C), (0, 3, 1, 2))


if __name__ == "__main__":
    key = jax.random.PRNGKey(0)
    k1, k2, k3, k4, k5, k6, k7 = jax.random.split(key, 7)

    N, C_SE, C, H, W = 1, 30, 336, 14, 14

    # Inputs (deterministic, matching the module's implied shapes).
    x145 = jax.random.normal(k1, (N, C_SE, 1, 1), dtype=jnp.float32)
    x143 = jax.random.normal(k2, (N, C, H, W), dtype=jnp.float32)

    # Parameters, deterministically initialized.
    # conv2d47: Conv2d(30, 336, 1x1) with bias -> PyTorch-native (Cout, Cin).
    w1 = jax.random.normal(k3, (C, C_SE), dtype=jnp.float32) * (1.0 / jnp.sqrt(C_SE))
    b1 = jax.random.normal(k4, (C,), dtype=jnp.float32) * 0.01
    # conv2d48: Conv2d(336, 336, 1x1, bias=False) -> PyTorch-native (Cout, Cin).
    w2 = jax.random.normal(k5, (C, C), dtype=jnp.float32) * (1.0 / jnp.sqrt(C))
    # batchnorm2d30: affine params (non-trivial to exercise the scale/bias fold).
    gamma = 1.0 + 0.1 * jax.random.normal(k6, (C,), dtype=jnp.float32)
    beta = 0.1 * jax.random.normal(k7, (C,), dtype=jnp.float32)

    out = fused_forward(x145, x143, w1, b1, w2, gamma, beta)
    out = jax.block_until_ready(out)

    ref = reference_forward(x145, x143, w1, b1, w2, gamma, beta)
    assert out.shape == (N, C, H, W), out.shape
    assert jnp.all(jnp.isfinite(out))
    assert jnp.allclose(out, ref, atol=1e-4, rtol=1e-4), float(jnp.max(jnp.abs(out - ref)))

    print("KERNEL_OK")
</pallas_src>

<mosaic_0001>
module attributes {stable_mosaic.version = 11 : i64} {
  func.func @_fused_kernel(%arg0: i32, %arg1: memref<30x1xf32, #tpu.memory_space<vmem>>, %arg2: memref<336x30xf32, #tpu.memory_space<vmem>>, %arg3: memref<336x1xf32, #tpu.memory_space<vmem>>, %arg4: memref<336x196xf32, #tpu.memory_space<vmem>>, %arg5: memref<168x336xf32, #tpu.memory_space<vmem>>, %arg6: memref<168x1xf32, #tpu.memory_space<vmem>>, %arg7: memref<168x1xf32, #tpu.memory_space<vmem>>, %arg8: memref<168x196xf32, #tpu.memory_space<vmem>>) attributes {dimension_semantics = [#tpu.dimension_semantics<parallel>], iteration_bounds = array<i64: 2>, scalar_prefetch = 0 : i64, scratch_operands = 0 : i64, tpu.core_type = #tpu.core_type<tc>, window_params = [{pipeline_mode = #tpu.pipeline_mode<synchronous>, transform_indices = @transform_0, window_bounds = array<i64: 30, 1>}, {pipeline_mode = #tpu.pipeline_mode<synchronous>, transform_indices = @transform_1, window_bounds = array<i64: 336, 30>}, {pipeline_mode = #tpu.pipeline_mode<synchronous>, transform_indices = @transform_2, window_bounds = array<i64: 336, 1>}, {pipeline_mode = #tpu.pipeline_mode<synchronous>, transform_indices = @transform_3, window_bounds = array<i64: 336, 196>}, {transform_indices = @transform_4, window_bounds = array<i64: 168, 336>}, {transform_indices = @transform_5, window_bounds = array<i64: 168, 1>}, {transform_indices = @transform_6, window_bounds = array<i64: 168, 1>}, {transform_indices = @transform_7, window_bounds = array<i64: 168, 196>}]} {
    %c0 = arith.constant 0 : index
    %c0_0 = arith.constant 0 : index
    %0 = vector.load %arg1[%c0, %c0_0] : memref<30x1xf32, #tpu.memory_space<vmem>>, vector<30x1xf32>
    %cst = arith.constant 0.000000e+00 : f32
    %1 = vector.broadcast %cst : f32 to vector<30x1xf32>
    %2 = arith.maximumf %0, %1 : vector<30x1xf32>
    %c0_1 = arith.constant 0 : index
    %c0_2 = arith.constant 0 : index
    %3 = vector.load %arg2[%c0_1, %c0_2] : memref<336x30xf32, #tpu.memory_space<vmem>>, vector<336x30xf32>
    %cst_3 = arith.constant dense<0.000000e+00> : vector<336x1xf32>
    %4 = tpu.matmul %3, %2, %cst_3 {dimension_numbers = #tpu.dot_dimension_numbers<[1], [0], [0], [1], [0, 0, 1, 1], [], []>} : vector<336x30xf32>, vector<30x1xf32>, vector<336x1xf32> -> vector<336x1xf32>
    %c0_4 = arith.constant 0 : index
    %c0_5 = arith.constant 0 : index
    %5 = vector.load %arg3[%c0_4, %c0_5] : memref<336x1xf32, #tpu.memory_space<vmem>>, vector<336x1xf32>
    %6 = arith.addf %4, %5 : vector<336x1xf32>
    %7 = arith.negf %6 : vector<336x1xf32>
    %8 = math.exp %7 : vector<336x1xf32>
    %cst_6 = arith.constant 1.000000e+00 : f32
    %9 = vector.broadcast %cst_6 : f32 to vector<336x1xf32>
    %10 = arith.addf %9, %8 : vector<336x1xf32>
    %11 = arith.divf %9, %10 : vector<336x1xf32>
    %c0_7 = arith.constant 0 : index
    %c0_8 = arith.constant 0 : index
    %12 = vector.load %arg4[%c0_7, %c0_8] : memref<336x196xf32, #tpu.memory_space<vmem>>, vector<336x196xf32>
    %13 = vector.broadcast %11 : vector<336x1xf32> to vector<336x196xf32>
    %14 = arith.mulf %12, %13 : vector<336x196xf32>
    %c0_9 = arith.constant 0 : index
    %c0_10 = arith.constant 0 : index
    %15 = vector.load %arg5[%c0_9, %c0_10] : memref<168x336xf32, #tpu.memory_space<vmem>>, vector<168x336xf32>
    %cst_11 = arith.constant dense<0.000000e+00> : vector<168x196xf32>
    %16 = tpu.matmul %15, %14, %cst_11 {dimension_numbers = #tpu.dot_dimension_numbers<[1], [0], [0], [1], [0, 0, 1, 1], [], []>} : vector<168x336xf32>, vector<336x196xf32>, vector<168x196xf32> -> vector<168x196xf32>
    %cst_12 = arith.constant dense<0.000000e+00> : vector<168xf32>
    %17 = vector.multi_reduction <add>, %16, %cst_12 [1] : vector<168x196xf32> to vector<168xf32>
    %18 = vector.shape_cast %17 : vector<168xf32> to vector<168x1xf32>
    %19 = arith.mulf %16, %16 : vector<168x196xf32>
    %cst_13 = arith.constant dense<0.000000e+00> : vector<168xf32>
    %20 = vector.multi_reduction <add>, %19, %cst_13 [1] : vector<168x196xf32> to vector<168xf32>
    %21 = vector.shape_cast %20 : vector<168xf32> to vector<168x1xf32>
    %cst_14 = arith.constant 0.00510204071 : f32
    %22 = vector.broadcast %cst_14 : f32 to vector<168x1xf32>
    %23 = arith.mulf %18, %22 : vector<168x1xf32>
    %cst_15 = arith.constant 0.00510204071 : f32
    %24 = vector.broadcast %cst_15 : f32 to vector<168x1xf32>
    %25 = arith.mulf %21, %24 : vector<168x1xf32>
    %26 = arith.mulf %23, %23 : vector<168x1xf32>
    %27 = arith.subf %25, %26 : vector<168x1xf32>
    %cst_16 = arith.constant 0.000000e+00 : f32
    %28 = vector.broadcast %cst_16 : f32 to vector<168x1xf32>
    %29 = arith.maximumf %27, %28 : vector<168x1xf32>
    %cst_17 = arith.constant 9.99999974E-6 : f32
    %30 = vector.broadcast %cst_17 : f32 to vector<168x1xf32>
    %31 = arith.addf %29, %30 : vector<168x1xf32>
    %32 = math.rsqrt %31 : vector<168x1xf32>
    %c0_18 = arith.constant 0 : index
    %c0_19 = arith.constant 0 : index
    %33 = vector.load %arg6[%c0_18, %c0_19] : memref<168x1xf32, #tpu.memory_space<vmem>>, vector<168x1xf32>
    %34 = arith.mulf %33, %32 : vector<168x1xf32>
    %c0_20 = arith.constant 0 : index
    %c0_21 = arith.constant 0 : index
    %35 = vector.load %arg7[%c0_20, %c0_21] : memref<168x1xf32, #tpu.memory_space<vmem>>, vector<168x1xf32>
    %36 = arith.mulf %23, %34 : vector<168x1xf32>
    %37 = arith.subf %35, %36 : vector<168x1xf32>
    %38 = vector.broadcast %34 : vector<168x1xf32> to vector<168x196xf32>
    %39 = arith.mulf %16, %38 : vector<168x196xf32>
    %40 = vector.broadcast %37 : vector<168x1xf32> to vector<168x196xf32>
    %41 = arith.addf %39, %40 : vector<168x196xf32>
    %c0_22 = arith.constant 0 : index
    %c0_23 = arith.constant 0 : index
    %42 = vector.load %arg8[%c0_22, %c0_23] : memref<168x196xf32, #tpu.memory_space<vmem>>, vector<168x196xf32>
    tpu.vector_store %arg8[%c0_22, %c0_23], %41 {strides = array<i32>} : memref<168x196xf32, #tpu.memory_space<vmem>>, vector<168x196xf32>,
    return
  }
  func.func @transform_0(%arg0: i32) -> (i32, i32) {
    %c0_i32 = arith.constant 0 : i32
    %c0_i32_0 = arith.constant 0 : i32
    %c0_i32_1 = arith.constant 0 : i32
    return %c0_i32, %c0_i32_0 : i32, i32
  }
  func.func @transform_1(%arg0: i32) -> (i32, i32) {
    %c0_i32 = arith.constant 0 : i32
    %c0_i32_0 = arith.constant 0 : i32
    %c0_i32_1 = arith.constant 0 : i32
    return %c0_i32, %c0_i32_0 : i32, i32
  }
  func.func @transform_2(%arg0: i32) -> (i32, i32) {
    %c0_i32 = arith.constant 0 : i32
    %c0_i32_0 = arith.constant 0 : i32
    %c0_i32_1 = arith.constant 0 : i32
    return %c0_i32, %c0_i32_0 : i32, i32
  }
  func.func @transform_3(%arg0: i32) -> (i32, i32) {
    %c0_i32 = arith.constant 0 : i32
    %c0_i32_0 = arith.constant 0 : i32
    %c0_i32_1 = arith.constant 0 : i32
    return %c0_i32, %c0_i32_0 : i32, i32
  }
  func.func @transform_4(%arg0: i32) -> (i32, i32) {
    %c0_i32 = arith.constant 0 : i32
    %c0_i32_0 = arith.constant 0 : i32
    return %arg0, %c0_i32 : i32, i32
  }
  func.func @transform_5(%arg0: i32) -> (i32, i32) {
    %c0_i32 = arith.constant 0 : i32
    %c0_i32_0 = arith.constant 0 : i32
    return %arg0, %c0_i32 : i32, i32
  }
  func.func @transform_6(%arg0: i32) -> (i32, i32) {
    %c0_i32 = arith.constant 0 : i32
    %c0_i32_0 = arith.constant 0 : i32
    return %arg0, %c0_i32 : i32, i32
  }
  func.func @transform_7(%arg0: i32) -> (i32, i32) {
    %c0_i32 = arith.constant 0 : i32
    %c0_i32_0 = arith.constant 0 : i32
    return %arg0, %c0_i32 : i32, i32
  }
}

</mosaic_0001>

<llo_original>
// kernel: tpu_custom_call.1
$region0: #{tpu_custom_call.1}
  #allocation0 [shape = 'u32[]', space=smem, size = 0x4, offset = 0x4, fixed_abs, tag = 'smem constant byte address 0x4 - core index']
  #allocation1 [shape = 'u32[144,128]{1,0:T(1,128)}', space=vmem, size = 0x12000, scoped, tag = 'internal scratch']
  %s0 = inlined_call_operand.vmem [shape: f32[30,1], index: 0, kind: input, shape index: {}]
  %s1 = inlined_call_operand.vmem [shape: f32[336,30], index: 1, kind: input, shape index: {}]
  %s2 = inlined_call_operand.vmem [shape: f32[336,1], index: 2, kind: input, shape index: {}]
  %s3 = inlined_call_operand.vmem [shape: f32[336,196], index: 3, kind: input, shape index: {}]
  %s4 = inlined_call_operand.vmem [shape: f32[336,336], index: 4, kind: input, shape index: {}]
  %s5 = inlined_call_operand.vmem [shape: f32[336,1], index: 5, kind: input, shape index: {}]
  %s6 = inlined_call_operand.vmem [shape: f32[336,1], index: 6, kind: input, shape index: {}]
  %s7 = inlined_call_operand.vmem [shape: f32[336,196], index: 7, kind: output, shape index: {}]
  %s8 = sld [smem:[#allocation0]]
  $region61: #{tpu_custom_call.1} parent=0
    _
  %s10 = ssub.s32 1, %s8
  %s11 = scalar_select 0, %s10, %s8
  loop: start=0, step=1, limit=4
  $region2: #{tpu_custom_call.1} parent=0 // loop_pre_header
    _
  $region3: #{tpu_custom_call.1} parent=0 // loop_header
    %s13 = sphi 0, %s17
    %p14 = scmp.ge.s32.totalorder %s13, 4
    %s21 = sphi 0, %s21
    %s23 = sphi 0, %s21
    %s24 = sphi 0, %s23
    %s38 = sphi 0, %s24
    %s42 = sphi 0, %s42
    %s44 = sphi 0, %s42
    %s45 = sphi 0, %s44
    %s59 = sphi 0, %s45
    %s63 = sphi 0, %s63
    %s65 = sphi 0, %s63
    %s66 = sphi 0, %s65
    %s80 = sphi 0, %s66
    %s84 = sphi 0, %s84
    %s86 = sphi 0, %s84
    %s87 = sphi 0, %s86
    %s101 = sphi 0, %s87
    %s107 = sphi 0, %s109
    %s110 = sphi 0, %s107
    %s111 = sphi 0, %s110
    %s127 = sphi 0, %s111
    %s133 = sphi 0, %s135
    %s136 = sphi 0, %s133
    %s137 = sphi 0, %s136
    %s153 = sphi 0, %s137
    %s159 = sphi 0, %s161
    %s162 = sphi 0, %s159
    %s163 = sphi 0, %s162
    %s179 = sphi 0, %s163
    %s185 = sphi 0, %s187
    %s188 = sphi 0, %s185
    %s189 = sphi 0, %s188
    %s205 = sphi 0, %s189
  $region4: #{tpu_custom_call.1} parent=0 // loop_header_branch
    %16 = sbr.rel (%p14) target = $region8
  $region5: #{tpu_custom_call.1} parent=0 // loop_body
    %s18 = ssub.s32 %s13, 1
    %s19 = ssub.s32 %s13, 2
    %s20 = sadd.s32 %s13, 1
    %s22 = sadd.s32 %s21, 1
    %p25 = scmp.eq.s32.totalorder %s13, 1
    %p26 = scmp.ne.s32.totalorder %s21, %s23
    %p27 = scmp.eq.s32.totalorder %s13, 0
    %p28 = por %p26, %p27
    %p29 = scmp.ne.s32.totalorder %s21, %s23
    %p30 = scmp.eq.s32.totalorder %s18, 1
    %p31 = por %p29, %p30
    %p32 = scmp.ne.s32.totalorder %s23, %s24
    %p33 = scmp.eq.s32.totalorder %s18, 0
    %p34 = por %p32, %p33
    %p35 = scmp.ne.s32.totalorder %s23, %s24
    %p36 = scmp.eq.s32.totalorder %s19, 1
    %p37 = por %p35, %p36
    %p39 = scmp.ne.s32.totalorder %s24, %s38
    %p40 = scmp.eq.s32.totalorder %s19, 0
    %p41 = por %p39, %p40
    %s43 = sadd.s32 %s42, 1
    %p46 = scmp.eq.s32.totalorder %s13, 1
    %p47 = scmp.ne.s32.totalorder %s42, %s44
    %p48 = scmp.eq.s32.totalorder %s13, 0
    %p49 = por %p47, %p48
    %p50 = scmp.ne.s32.totalorder %s42, %s44
    %p51 = scmp.eq.s32.totalorder %s18, 1
    %p52 = por %p50, %p51
    %p53 = scmp.ne.s32.totalorder %s44, %s45
    %p54 = scmp.eq.s32.totalorder %s18, 0
    %p55 = por %p53, %p54
    %p56 = scmp.ne.s32.totalorder %s44, %s45
    %p57 = scmp.eq.s32.totalorder %s19, 1
    %p58 = por %p56, %p57
    %p60 = scmp.ne.s32.totalorder %s45, %s59
    %p61 = scmp.eq.s32.totalorder %s19, 0
    %p62 = por %p60, %p61
    %s64 = sadd.s32 %s63, 1
    %p67 = scmp.eq.s32.totalorder %s13, 1
    %p68 = scmp.ne.s32.totalorder %s63, %s65
    %p69 = scmp.eq.s32.totalorder %s13, 0
    %p70 = por %p68, %p69
    %p71 = scmp.ne.s32.totalorder %s63, %s65
    %p72 = scmp.eq.s32.totalorder %s18, 1
    %p73 = por %p71, %p72
    %p74 = scmp.ne.s32.totalorder %s65, %s66
    %p75 = scmp.eq.s32.totalorder %s18, 0
    %p76 = por %p74, %p75
    %p77 = scmp.ne.s32.totalorder %s65, %s66
    %p78 = scmp.eq.s32.totalorder %s19, 1
    %p79 = por %p77, %p78
    %p81 = scmp.ne.s32.totalorder %s66, %s80
    %p82 = scmp.eq.s32.totalorder %s19, 0
    %p83 = por %p81, %p82
    %s85 = sadd.s32 %s84, 1
    %p88 = scmp.eq.s32.totalorder %s13, 1
    %p89 = scmp.ne.s32.totalorder %s84, %s86
    %p90 = scmp.eq.s32.totalorder %s13, 0
    %p91 = por %p89, %p90
    %p92 = scmp.ne.s32.totalorder %s84, %s86
    %p93 = scmp.eq.s32.totalorder %s18, 1
    %p94 = por %p92, %p93
    %p95 = scmp.ne.s32.totalorder %s86, %s87
    %p96 = scmp.eq.s32.totalorder %s18, 0
    %p97 = por %p95, %p96
    %p98 = scmp.ne.s32.totalorder %s86, %s87
    %p99 = scmp.eq.s32.totalorder %s19, 1
    %p100 = por %p98, %p99
    %p102 = scmp.ne.s32.totalorder %s87, %s101
    %p103 = scmp.eq.s32.totalorder %s19, 0
    %p104 = por %p102, %p103
    %s105 = ssub.s32 %s13, %s20
    %p106 = scmp.eq.s32.totalorder %s105, 0
    %s108 = sadd.s32 %s107, 1
    %s109 = scalar_select %p106, %s107, %s108
    %p112 = pneg %p106
    %p113 = scmp.eq.s32.totalorder %s13, 1
    %p114 = por %p112, %p113
    %p115 = scmp.ne.s32.totalorder %s107, %s110
    %p116 = scmp.eq.s32.totalorder %s13, 0
    %p117 = por %p115, %p116
    %p118 = scmp.ne.s32.totalorder %s107, %s110
    %p119 = scmp.eq.s32.totalorder %s18, 1
    %p120 = por %p118, %p119
    %p121 = scmp.ne.s32.totalorder %s110, %s111
    %p122 = scmp.eq.s32.totalorder %s18, 0
    %p123 = por %p121, %p122
    %p124 = scmp.ne.s32.totalorder %s110, %s111
    %p125 = scmp.eq.s32.totalorder %s19, 1
    %p126 = por %p124, %p125
    %p128 = scmp.ne.s32.totalorder %s111, %s127
    %p129 = scmp.eq.s32.totalorder %s19, 0
    %p130 = por %p128, %p129
    %s131 = ssub.s32 %s13, %s20
    %p132 = scmp.eq.s32.totalorder %s131, 0
    %s134 = sadd.s32 %s133, 1
    %s135 = scalar_select %p132, %s133, %s134
    %p138 = pneg %p132
    %p139 = scmp.eq.s32.totalorder %s13, 1
    %p140 = por %p138, %p139
    %p141 = scmp.ne.s32.totalorder %s133, %s136
    %p142 = scmp.eq.s32.totalorder %s13, 0
    %p143 = por %p141, %p142
    %p144 = scmp.ne.s32.totalorder %s133, %s136
    %p145 = scmp.eq.s32.totalorder %s18, 1
    %p146 = por %p144, %p145
    %p147 = scmp.ne.s32.totalorder %s136, %s137
    %p148 = scmp.eq.s32.totalorder %s18, 0
    %p149 = por %p147, %p148
    %p150 = scmp.ne.s32.totalorder %s136, %s137
    %p151 = scmp.eq.s32.totalorder %s19, 1
    %p152 = por %p150, %p151
    %p154 = scmp.ne.s32.totalorder %s137, %s153
    %p155 = scmp.eq.s32.totalorder %s19, 0
    %p156 = por %p154, %p155
    %s157 = ssub.s32 %s13, %s20
    %p158 = scmp.eq.s32.totalorder %s157, 0
    %s160 = sadd.s32 %s159, 1
    %s161 = scalar_select %p158, %s159, %s160
    %p164 = pneg %p158
    %p165 = scmp.eq.s32.totalorder %s13, 1
    %p166 = por %p164, %p165
    %p167 = scmp.ne.s32.totalorder %s159, %s162
    %p168 = scmp.eq.s32.totalorder %s13, 0
    %p169 = por %p167, %p168
    %p170 = scmp.ne.s32.totalorder %s159, %s162
    %p171 = scmp.eq.s32.totalorder %s18, 1
    %p172 = por %p170, %p171
    %p173 = scmp.ne.s32.totalorder %s162, %s163
    %p174 = scmp.eq.s32.totalorder %s18, 0
    %p175 = por %p173, %p174
    %p176 = scmp.ne.s32.totalorder %s162, %s163
    %p177 = scmp.eq.s32.totalorder %s19, 1
    %p178 = por %p176, %p177
    %p180 = scmp.ne.s32.totalorder %s163, %s179
    %p181 = scmp.eq.s32.totalorder %s19, 0
    %p182 = por %p180, %p181
    %s183 = ssub.s32 %s13, %s20
    %p184 = scmp.eq.s32.totalorder %s183, 0
    %s186 = sadd.s32 %s185, 1
    %s187 = scalar_select %p184, %s185, %s186
    %p190 = pneg %p184
    %p191 = scmp.eq.s32.totalorder %s13, 1
    %p192 = por %p190, %p191
    %p193 = scmp.ne.s32.totalorder %s185, %s188
    %p194 = scmp.eq.s32.totalorder %s13, 0
    %p195 = por %p193, %p194
    %p196 = scmp.ne.s32.totalorder %s185, %s188
    %p197 = scmp.eq.s32.totalorder %s18, 1
    %p198 = por %p196, %p197
    %p199 = scmp.ne.s32.totalorder %s188, %s189
    %p200 = scmp.eq.s32.totalorder %s18, 0
    %p201 = por %p199, %p200
    %p202 = scmp.ne.s32.totalorder %s188, %s189
    %p203 = scmp.eq.s32.totalorder %s19, 1
    %p204 = por %p202, %p203
    %p206 = scmp.ne.s32.totalorder %s189, %s205
    %p207 = scmp.eq.s32.totalorder %s19, 0
    %p208 = por %p206, %p207
    %p209 = scmp.le.s32.totalorder 1, %s13
    %p210 = scmp.lt.s32.totalorder %s13, 3
    %p211 = pnand %p209, %p210
    %p212 = pneg %p211
    // Predicated region
    $region9: #{tpu_custom_call.1} parent=5 // pred_check
      _
    $region10: #{tpu_custom_call.1} parent=5 // pred_check_branch
      %214 = sbr.rel (%p211) target = $region12
    $region11: #{tpu_custom_call.1} parent=5 // pred_region
      %s215 = ssub.s32 %s13, 1
      // Predicated region
      $region13: #{tpu_custom_call.1} parent=11 // pred_check
        %p216 = pneg %p34
      $region14: #{tpu_custom_call.1} parent=11 // pred_check_branch
        %218 = sbr.rel (%p216) target = $region16
      $region15: #{tpu_custom_call.1} parent=11 // pred_region
        _
      $region16: #{tpu_custom_call.1} parent=11 // pred_fallthru
        _
      // Predicated region
      $region17: #{tpu_custom_call.1} parent=11 // pred_check
        %p219 = pneg %p55
      $region18: #{tpu_custom_call.1} parent=11 // pred_check_branch
        %221 = sbr.rel (%p219) target = $region20
      $region19: #{tpu_custom_call.1} parent=11 // pred_region
        _
      $region20: #{tpu_custom_call.1} parent=11 // pred_fallthru
        _
      // Predicated region
      $region21: #{tpu_custom_call.1} parent=11 // pred_check
        %p222 = pneg %p76
      $region22: #{tpu_custom_call.1} parent=11 // pred_check_branch
        %224 = sbr.rel (%p222) target = $region24
      $region23: #{tpu_custom_call.1} parent=11 // pred_region
        _
      $region24: #{tpu_custom_call.1} parent=11 // pred_fallthru
        _
      // Predicated region
      $region25: #{tpu_custom_call.1} parent=11 // pred_check
        %p225 = pneg %p97
      $region26: #{tpu_custom_call.1} parent=11 // pred_check_branch
        %227 = sbr.rel (%p225) target = $region28
      $region27: #{tpu_custom_call.1} parent=11 // pred_region
        _
      $region28: #{tpu_custom_call.1} parent=11 // pred_fallthru
        _
    $region12: #{tpu_custom_call.1} parent=5 // pred_fallthru
      _
    %p228 = scmp.lt.s32.totalorder %s13, 2
    // Predicated region
    $region29: #{tpu_custom_call.1} parent=5 // pred_check
      %p229 = pneg %p228
    $region30: #{tpu_custom_call.1} parent=5 // pred_check_branch
      %231 = sbr.rel (%p229) target = $region32
    $region31: #{tpu_custom_call.1} parent=5 // pred_region
      // Predicated region
      $region33: #{tpu_custom_call.1} parent=31 // pred_check
        %p232 = pneg %p117
      $region34: #{tpu_custom_call.1} parent=31 // pred_check_branch
        %234 = sbr.rel (%p232) target = $region36
      $region35: #{tpu_custom_call.1} parent=31 // pred_region
        %s235 = smul.u32 21, %s13
        %p236 = scmp.lt.s32.totalorder %s235, 41
        %s237 = scalar_select %p236, %s235, 41
        %s238 = smul.addr %s237, 3
        %s239 = smul.addr %s238, 8
        %s240 = scalar_lea.vmem %s4, %s239
        %s241 = smul.u32 21, %s13
      $region36: #{tpu_custom_call.1} parent=31 // pred_fallthru
        _
      // Predicated region
      $region37: #{tpu_custom_call.1} parent=31 // pred_check
        %p242 = pneg %p143
      $region38: #{tpu_custom_call.1} parent=31 // pred_check_branch
        %244 = sbr.rel (%p242) target = $region40
      $region39: #{tpu_custom_call.1} parent=31 // pred_region
        %s245 = smul.u32 21, %s13
        %p246 = scmp.lt.s32.totalorder %s245, 41
        %s247 = scalar_select %p246, %s245, 41
        %s248 = smul.addr %s247, 8
        %s249 = scalar_lea.vmem %s5, %s248
        %s250 = smul.u32 21, %s13
      $region40: #{tpu_custom_call.1} parent=31 // pred_fallthru
        _
      // Predicated region
      $region41: #{tpu_custom_call.1} parent=31 // pred_check
        %p251 = pneg %p169
      $region42: #{tpu_custom_call.1} parent=31 // pred_check_branch
        %253 = sbr.rel (%p251) target = $region44
      $region43: #{tpu_custom_call.1} parent=31 // pred_region
        %s254 = smul.u32 21, %s13
        %p255 = scmp.lt.s32.totalorder %s254, 41
        %s256 = scalar_select %p255, %s254, 41
        %s257 = smul.addr %s256, 8
        %s258 = scalar_lea.vmem %s6, %s257
        %s259 = smul.u32 21, %s13
      $region44: #{tpu_custom_call.1} parent=31 // pred_fallthru
        _
    $region32: #{tpu_custom_call.1} parent=5 // pred_fallthru
      _
    %p260 = scmp.le.s32.totalorder 1, %s13
    %p261 = scmp.lt.s32.totalorder %s13, 3
    %p262 = pnand %p260, %p261
    %p263 = pneg %p262
    // Predicated region
    $region45: #{tpu_custom_call.1} parent=5 // pred_check
      _
    $region46: #{tpu_custom_call.1} parent=5 // pred_check_branch
      %265 = sbr.rel (%p262) target = $region48
    $region47: #{tpu_custom_call.1} parent=5 // pred_region
      %s266 = ssub.s32 %s13, 1
      %p267 = pneg %p34
      %p268 = pneg %p31
      %p269 = pneg %p55
      %p270 = pneg %p52
      %p271 = pneg %p76
      %p272 = pneg %p73
      %p273 = pneg %p97
      %p274 = pneg %p94
      %s275 = smul.u32 21, %s18
      %p276 = scmp.lt.s32.totalorder %s275, 41
      %s277 = scalar_select %p276, %s275, 41
      %s278 = smul.addr %s277, 3
      %s279 = smul.addr %s278, 8
      %s280 = scalar_lea.vmem %s4, %s279
      %p281 = pneg %p123
      %p282 = pneg %p120
      %s283 = smul.u32 21, %s18
      %p284 = scmp.lt.s32.totalorder %s283, 41
      %s285 = scalar_select %p284, %s283, 41
      %s286 = smul.addr %s285, 8
      %s287 = scalar_lea.vmem %s5, %s286
      %p288 = pneg %p149
      %p289 = pneg %p146
      %s290 = smul.u32 21, %s18
      %p291 = scmp.lt.s32.totalorder %s290, 41
      %s292 = scalar_select %p291, %s290, 41
      %s293 = smul.addr %s292, 8
      %s294 = scalar_lea.vmem %s6, %s293
      %p295 = pneg %p175
      %p296 = pneg %p172
      %p297 = pneg %p201
      %p298 = pneg %p198
      %s299 = smul.u32 21, %s18
      %p300 = scmp.lt.s32.totalorder %s299, 41
      %s301 = scalar_select %p300, %s299, 41
      %s302 = smul.addr %s301, 2
      %s303 = smul.addr %s302, 8
      %s304 = scalar_lea.vmem %s7, %s303
      %s305 = smul.u32 21, %s18
      %p306 = scmp.lt.s32.totalorder %s305, 41
      %s307 = scalar_select %p306, %s305, 41
      %s308 = smul.addr %s307, 3
      %s309 = smul.addr %s308, 8
      %s310 = scalar_lea.vmem %s4, %s309
      %s311 = smul.u32 21, %s18
      %s312 = smul.u32 21, %s18
      %p313 = scmp.lt.s32.totalorder %s312, 41
      %s314 = scalar_select %p313, %s312, 41
      %s315 = smul.addr %s314, 8
      %s316 = scalar_lea.vmem %s5, %s315
      %s317 = smul.u32 21, %s18
      %s318 = smul.u32 21, %s18
      %p319 = scmp.lt.s32.totalorder %s318, 41
      %s320 = scalar_select %p319, %s318, 41
      %s321 = smul.addr %s320, 8
      %s322 = scalar_lea.vmem %s6, %s321
      %s323 = smul.u32 21, %s18
      %s324 = smul.u32 21, %s18
      %p325 = scmp.lt.s32.totalorder %s324, 41
      %s326 = scalar_select %p325, %s324, 41
      %s327 = smul.addr %s326, 2
      %s328 = smul.addr %s327, 8
      %s329 = scalar_lea.vmem %s7, %s328
      %s330 = smul.u32 21, %s18
      %v331 = vld [vmem:[%s0] sm:$0xff]
      %v332 = vld [vmem:[%s0 + $0x8] sm:$0xff]
      %v333 = vld [vmem:[%s0 + $0x10] sm:$0xff]
      %v334 = vld [vmem:[%s0 + $0x18] sm:$0x3f]
      %v335 = vmax.f32 %v331, 0.0
      %v336 = vmax.f32 %v332, 0.0
      %v337 = vmax.f32 %v333, 0.0
      %v338 = vmax.f32 %v334, 0.0
      %v339 = vld [vmem:[%s1] sm:$0xff]
      %v340 = vld [vmem:[%s1 + $0x8] sm:$0xff]
      %v341 = vld [vmem:[%s1 + $0x10] sm:$0xff]
      %v342 = vld [vmem:[%s1 + $0x18] sm:$0xff]
      %v343 = vld [vmem:[%s1 + $0x20] sm:$0xff]
      %v344 = vld [vmem:[%s1 + $0x28] sm:$0xff]
      %v345 = vld [vmem:[%s1 + $0x30] sm:$0xff]
      %v346 = vld [vmem:[%s1 + $0x38] sm:$0xff]
      %v347 = vld [vmem:[%s1 + $0x40] sm:$0xff]
      %v348 = vld [vmem:[%s1 + $0x48] sm:$0xff]
      %v349 = vld [vmem:[%s1 + $0x50] sm:$0xff]
      %v350 = vld [vmem:[%s1 + $0x58] sm:$0xff]
      %v351 = vld [vmem:[%s1 + $0x60] sm:$0xff]
      %v352 = vld [vmem:[%s1 + $0x68] sm:$0xff]
      %v353 = vld [vmem:[%s1 + $0x70] sm:$0xff]
      %v354 = vld [vmem:[%s1 + $0x78] sm:$0xff]
      %v355 = vld [vmem:[%s1 + $0x80] sm:$0xff]
      %v356 = vld [vmem:[%s1 + $0x88] sm:$0xff]
      %v357 = vld [vmem:[%s1 + $0x90] sm:$0xff]
      %v358 = vld [vmem:[%s1 + $0x98] sm:$0xff]
      %v359 = vld [vmem:[%s1 + $0xa0] sm:$0xff]
      %v360 = vld [vmem:[%s1 + $0xa8] sm:$0xff]
      %v361 = vld [vmem:[%s1 + $0xb0] sm:$0xff]
      %v362 = vld [vmem:[%s1 + $0xb8] sm:$0xff]
      %v363 = vld [vmem:[%s1 + $0xc0] sm:$0xff]
      %v364 = vld [vmem:[%s1 + $0xc8] sm:$0xff]
      %v365 = vld [vmem:[%s1 + $0xd0] sm:$0xff]
      %v366 = vld [vmem:[%s1 + $0xd8] sm:$0xff]
      %v367 = vld [vmem:[%s1 + $0xe0] sm:$0xff]
      %v368 = vld [vmem:[%s1 + $0xe8] sm:$0xff]
      %v369 = vld [vmem:[%s1 + $0xf0] sm:$0xff]
      %v370 = vld [vmem:[%s1 + $0xf8] sm:$0xff]
      %v371 = vld [vmem:[%s1 + $0x100] sm:$0xff]
      %v372 = vld [vmem:[%s1 + $0x108] sm:$0xff]
      %v373 = vld [vmem:[%s1 + $0x110] sm:$0xff]
      %v374 = vld [vmem:[%s1 + $0x118] sm:$0xff]
      %v375 = vld [vmem:[%s1 + $0x120] sm:$0xff]
      %v376 = vld [vmem:[%s1 + $0x128] sm:$0xff]
      %v377 = vld [vmem:[%s1 + $0x130] sm:$0xff]
      %v378 = vld [vmem:[%s1 + $0x138] sm:$0xff]
      %v379 = vld [vmem:[%s1 + $0x140] sm:$0xff]
      %v380 = vld [vmem:[%s1 + $0x148] sm:$0xff]
      %v381 = vld [vmem:[%s2] sm:$0xff]
      %v382 = vld [vmem:[%s2 + $0x8] sm:$0xff]
      %v383 = vld [vmem:[%s2 + $0x10] sm:$0xff]
      %v384 = vld [vmem:[%s2 + $0x18] sm:$0xff]
      %v385 = vld [vmem:[%s2 + $0x20] sm:$0xff]
      %v386 = vld [vmem:[%s2 + $0x28] sm:$0xff]
      %v387 = vld [vmem:[%s2 + $0x30] sm:$0xff]
      %v388 = vld [vmem:[%s2 + $0x38] sm:$0xff]
      %v389 = vld [vmem:[%s2 + $0x40] sm:$0xff]
      %v390 = vld [vmem:[%s2 + $0x48] sm:$0xff]
      %v391 = vld [vmem:[%s2 + $0x50] sm:$0xff]
      %v392 = vld [vmem:[%s2 + $0x58] sm:$0xff]
      %v393 = vld [vmem:[%s2 + $0x60] sm:$0xff]
      %v394 = vld [vmem:[%s2 + $0x68] sm:$0xff]
      %v395 = vld [vmem:[%s2 + $0x70] sm:$0xff]
      %v396 = vld [vmem:[%s2 + $0x78] sm:$0xff]
      %v397 = vld [vmem:[%s2 + $0x80] sm:$0xff]
      %v398 = vld [vmem:[%s2 + $0x88] sm:$0xff]
      %v399 = vld [vmem:[%s2 + $0x90] sm:$0xff]
      %v400 = vld [vmem:[%s2 + $0x98] sm:$0xff]
      %v401 = vld [vmem:[%s2 + $0xa0] sm:$0xff]
      %v402 = vld [vmem:[%s2 + $0xa8] sm:$0xff]
      %v403 = vld [vmem:[%s2 + $0xb0] sm:$0xff]
      %v404 = vld [vmem:[%s2 + $0xb8] sm:$0xff]
      %v405 = vld [vmem:[%s2 + $0xc0] sm:$0xff]
      %v406 = vld [vmem:[%s2 + $0xc8] sm:$0xff]
      %v407 = vld [vmem:[%s2 + $0xd0] sm:$0xff]
      %v408 = vld [vmem:[%s2 + $0xd8] sm:$0xff]
      %v409 = vld [vmem:[%s2 + $0xe0] sm:$0xff]
      %v410 = vld [vmem:[%s2 + $0xe8] sm:$0xff]
      %v411 = vld [vmem:[%s2 + $0xf0] sm:$0xff]
      %v412 = vld [vmem:[%s2 + $0xf8] sm:$0xff]
      %v413 = vld [vmem:[%s2 + $0x100] sm:$0xff]
      %v414 = vld [vmem:[%s2 + $0x108] sm:$0xff]
      %v415 = vld [vmem:[%s2 + $0x110] sm:$0xff]
      %v416 = vld [vmem:[%s2 + $0x118] sm:$0xff]
      %v417 = vld [vmem:[%s2 + $0x120] sm:$0xff]
      %v418 = vld [vmem:[%s2 + $0x128] sm:$0xff]
      %v419 = vld [vmem:[%s2 + $0x130] sm:$0xff]
      %v420 = vld [vmem:[%s2 + $0x138] sm:$0xff]
      %v421 = vld [vmem:[%s2 + $0x140] sm:$0xff]
      %v422 = vld [vmem:[%s2 + $0x148] sm:$0xff]
      %vm423 = vcmask 244736
      %v425 = vsel %vm423, %v339, 0
      %v428 = vsel %vm423, %v340, 0
      %v431 = vsel %vm423, %v341, 0
      %v434 = vsel %vm423, %v342, 0
      %v437 = vsel %vm423, %v343, 0
      %v440 = vsel %vm423, %v344, 0
      %v443 = vsel %vm423, %v345, 0
      %v446 = vsel %vm423, %v346, 0
      %v449 = vsel %vm423, %v347, 0
      %v452 = vsel %vm423, %v348, 0
      %v455 = vsel %vm423, %v349, 0
      %v458 = vsel %vm423, %v350, 0
      %v461 = vsel %vm423, %v351, 0
      %v464 = vsel %vm423, %v352, 0
      %v467 = vsel %vm423, %v353, 0
      %v470 = vsel %vm423, %v354, 0
      %v473 = vsel %vm423, %v355, 0
      %v476 = vsel %vm423, %v356, 0
      %v479 = vsel %vm423, %v357, 0
      %v482 = vsel %vm423, %v358, 0
      %v485 = vsel %vm423, %v359, 0
      %v488 = vsel %vm423, %v360, 0
      %v491 = vsel %vm423, %v361, 0
      %v494 = vsel %vm423, %v362, 0
      %v497 = vsel %vm423, %v363, 0
      %v500 = vsel %vm423, %v364, 0
      %v503 = vsel %vm423, %v365, 0
      %v506 = vsel %vm423, %v366, 0
      %v509 = vsel %vm423, %v367, 0
      %v512 = vsel %vm423, %v368, 0
      %v515 = vsel %vm423, %v369, 0
      %v518 = vsel %vm423, %v370, 0
      %v521 = vsel %vm423, %v371, 0
      %v524 = vsel %vm423, %v372, 0
      %v527 = vsel %vm423, %v373, 0
      %v530 = vsel %vm423, %v374, 0
      %v533 = vsel %vm423, %v375, 0
      %v536 = vsel %vm423, %v376, 0
      %v539 = vsel %vm423, %v377, 0
      %v542 = vsel %vm423, %v378, 0
      %v545 = vsel %vm423, %v379, 0
      %v548 = vsel %vm423, %v380, 0
      %vm550 = vcmask 1045504
      %v552 = vsel %vm550, %v338, 0
      %554 = vmatprep.subr.mxu0 0.0
      %555 = vmatpush1.msra.mxu0 %v335
      %556 = vmatprep.subr.mxu0 0.0
      %557 = vmatpush1.msra.mxu0 %v336
      %558 = vmatprep.subr.mxu0 0.0
      %559 = vmatpush1.msra.mxu0 %v337
      %560 = vmatprep.subr.mxu0 0.0
      %561 = vmatpush1.msra.mxu0 %v552
      %562 = vmatprep.subr.mxu0 0.0
      %563 = vmatpush1.msra.mxu0 0.0
      %564 = vmatprep.subr.mxu0 0.0
      %565 = vmatpush1.msra.mxu0 0.0
      %566 = vmatprep.subr.mxu0 0.0
      %567 = vmatpush1.msra.mxu0 0.0
      %568 = vmatprep.subr.mxu0 0.0
      %569 = vmatpush1.msra.mxu0 0.0
      %570 = vmatprep.subr.mxu0 0.0
      %571 = vmatpush1.msra.mxu0 0.0
      %572 = vmatprep.subr.mxu0 0.0
      %573 = vmatpush1.msra.mxu0 0.0
      %574 = vmatprep.subr.mxu0 0.0
      %575 = vmatpush1.msra.mxu0 0.0
      %576 = vmatprep.subr.mxu0 0.0
      %577 = vmatpush1.msra.mxu0 0.0
      %578 = vmatprep.subr.mxu0 0.0
      %579 = vmatpush1.msra.mxu0 0.0
      %580 = vmatprep.subr.mxu0 0.0
      %581 = vmatpush1.msra.mxu0 0.0
      %582 = vmatprep.subr.mxu0 0.0
      %583 = vmatpush1.msra.mxu0 0.0
      %584 = vmatprep.subr.mxu0 0.0
      %585 = vmatpush1.msra.mxu0 0.0
      %586 = vmatprep.subr.mxu0 0.0
      %587 = vmatpush1.msra.mxu0 0.0
      %588 = vmatprep.subr.mxu0 0.0
      %589 = vmatpush1.msra.mxu0 0.0
      %590 = vmatprep.subr.mxu0 0.0
      %591 = vmatpush1.msra.mxu0 0.0
      %592 = vmatprep.subr.mxu0 0.0
      %593 = vmatpush1.msra.mxu0 0.0
      %594 = vmatprep.subr.mxu0 0.0
      %595 = vmatpush1.msra.mxu0 0.0
      %596 = vmatprep.subr.mxu0 0.0
      %597 = vmatpush1.msra.mxu0 0.0
      %598 = vmatprep.subr.mxu0 0.0
      %599 = vmatpush1.msra.mxu0 0.0
      %600 = vmatprep.subr.mxu0 0.0
      %601 = vmatpush1.msra.mxu0 0.0
      %602 = vmatprep.subr.mxu0 0.0
      %603 = vmatpush1.msra.mxu0 0.0
      %604 = vmatprep.subr.mxu0 0.0
      %605 = vmatpush1.msra.mxu0 0.0
      %606 = vmatprep.subr.mxu0 0.0
      %607 = vmatpush1.msra.mxu0 0.0
      %608 = vmatprep.subr.mxu0 0.0
      %609 = vmatpush1.msra.mxu0 0.0
      %610 = vmatprep.subr.mxu0 0.0
      %611 = vmatpush1.msra.mxu0 0.0
      %612 = vmatprep.subr.mxu0 0.0
      %613 = vmatpush1.msra.mxu0 0.0
      %614 = vmatprep.subr.mxu0 0.0
      %615 = vmatpush1.msra.mxu0 0.0
      %616 = vmatprep.subr.mxu0 0.0
      %617 = vmatpush1.msra.mxu0 0.0
      %618 = vmatprep.mubr.f32.mxu0 0.0
      %619 = vmatmul.mubr.f32.gmra.mrb[0].mxu0 %v425
      %v620 = vpop.f32.mrb[0].mxu0
      %v621 = vadd.f32 %v381, %v620
      %v622 = vpop.f32.mrb[0].mxu0
      %623 = vmatprep.mubr.f32.mxu0 0.0
      %624 = vmatmul.mubr.f32.gmra.mrb[0].mxu0 %v428
      %v625 = vpop.f32.mrb[0].mxu0
      %v626 = vadd.f32 %v382, %v625
      %v627 = vpop.f32.mrb[0].mxu0
      %628 = vmatprep.mubr.f32.mxu0 0.0
      %629 = vmatmul.mubr.f32.gmra.mrb[0].mxu0 %v431
      %v630 = vpop.f32.mrb[0].mxu0
      %v631 = vadd.f32 %v383, %v630
      %v632 = vpop.f32.mrb[0].mxu0
      %633 = vmatprep.mubr.f32.mxu0 0.0
      %634 = vmatmul.mubr.f32.gmra.mrb[0].mxu0 %v434
      %v635 = vpop.f32.mrb[0].mxu0
      %v636 = vadd.f32 %v384, %v635
      %v637 = vpop.f32.mrb[0].mxu0
      %638 = vmatprep.mubr.f32.mxu0 0.0
      %639 = vmatmul.mubr.f32.gmra.mrb[0].mxu0 %v437
      %v640 = vpop.f32.mrb[0].mxu0
      %v641 = vadd.f32 %v385, %v640
      %v642 = vpop.f32.mrb[0].mxu0
      %643 = vmatprep.mubr.f32.mxu0 0.0
      %644 = vmatmul.mubr.f32.gmra.mrb[0].mxu0 %v440
      %v645 = vpop.f32.mrb[0].mxu0
      %v646 = vadd.f32 %v386, %v645
      %v647 = vpop.f32.mrb[0].mxu0
      %648 = vmatprep.mubr.f32.mxu0 0.0
      %649 = vmatmul.mubr.f32.gmra.mrb[0].mxu0 %v443
      %v650 = vpop.f32.mrb[0].mxu0
      %v651 = vadd.f32 %v387, %v650
      %v652 = vpop.f32.mrb[0].mxu0
      %653 = vmatprep.mubr.f32.mxu0 0.0
      %654 = vmatmul.mubr.f32.gmra.mrb[0].mxu0 %v446
      %v655 = vpop.f32.mrb[0].mxu0
      %v656 = vadd.f32 %v388, %v655
      %v657 = vpop.f32.mrb[0].mxu0
      %658 = vmatprep.mubr.f32.mxu0 0.0
      %659 = vmatmul.mubr.f32.gmra.mrb[0].mxu0 %v449
      %v660 = vpop.f32.mrb[0].mxu0
      %v661 = vadd.f32 %v389, %v660
      %v662 = vpop.f32.mrb[0].mxu0
      %663 = vmatprep.mubr.f32.mxu0 0.0
      %664 = vmatmul.mubr.f32.gmra.mrb[0].mxu0 %v452
      %v665 = vpop.f32.mrb[0].mxu0
      %v666 = vadd.f32 %v390, %v665
      %v667 = vpop.f32.mrb[0].mxu0
      %668 = vmatprep.mubr.f32.mxu0 0.0
      %669 = vmatmul.mubr.f32.gmra.mrb[0].mxu0 %v455
      %v670 = vpop.f32.mrb[0].mxu0
      %v671 = vadd.f32 %v391, %v670
      %v672 = vpop.f32.mrb[0].mxu0
      %673 = vmatprep.mubr.f32.mxu0 0.0
      %674 = vmatmul.mubr.f32.gmra.mrb[0].mxu0 %v458
      %v675 = vpop.f32.mrb[0].mxu0
      %v676 = vadd.f32 %v392, %v675
      %v677 = vpop.f32.mrb[0].mxu0
      %678 = vmatprep.mubr.f32.mxu0 0.0
      %679 = vmatmul.mubr.f32.gmra.mrb[0].mxu0 %v461
      %v680 = vpop.f32.mrb[0].mxu0
      %v681 = vadd.f32 %v393, %v680
      %v682 = vpop.f32.mrb[0].mxu0
      %683 = vmatprep.mubr.f32.mxu0 0.0
      %684 = vmatmul.mubr.f32.gmra.mrb[0].mxu0 %v464
      %v685 = vpop.f32.mrb[0].mxu0
      %v686 = vadd.f32 %v394, %v685
      %v687 = vpop.f32.mrb[0].mxu0
      %688 = vmatprep.mubr.f32.mxu0 0.0
      %689 = vmatmul.mubr.f32.gmra.mrb[0].mxu0 %v467
      %v690 = vpop.f32.mrb[0].mxu0
      %v691 = vadd.f32 %v395, %v690
      %v692 = vpop.f32.mrb[0].mxu0
      %693 = vmatprep.mubr.f32.mxu0 0.0
      %694 = vmatmul.mubr.f32.gmra.mrb[0].mxu0 %v470
      %v695 = vpop.f32.mrb[0].mxu0
      %v696 = vadd.f32 %v396, %v695
      %v697 = vpop.f32.mrb[0].mxu0
      %698 = vmatprep.mubr.f32.mxu0 0.0
      %699 = vmatmul.mubr.f32.gmra.mrb[0].mxu0 %v473
      %v700 = vpop.f32.mrb[0].mxu0
      %v701 = vadd.f32 %v397, %v700
      %v702 = vpop.f32.mrb[0].mxu0
      %703 = vmatprep.mubr.f32.mxu0 0.0
      %704 = vmatmul.mubr.f32.gmra.mrb[0].mxu0 %v476
      %v705 = vpop.f32.mrb[0].mxu0
      %v706 = vadd.f32 %v398, %v705
      %v707 = vpop.f32.mrb[0].mxu0
      %708 = vmatprep.mubr.f32.mxu0 0.0
      %709 = vmatmul.mubr.f32.gmra.mrb[0].mxu0 %v479
      %v710 = vpop.f32.mrb[0].mxu0
      %v711 = vadd.f32 %v399, %v710
      %v712 = vpop.f32.mrb[0].mxu0
      %713 = vmatprep.mubr.f32.mxu0 0.0
      %714 = vmatmul.mubr.f32.gmra.mrb[0].mxu0 %v482
      %v715 = vpop.f32.mrb[0].mxu0
      %v716 = vadd.f32 %v400, %v715
      %v717 = vpop.f32.mrb[0].mxu0
      %718 = vmatprep.mubr.f32.mxu0 0.0
      %719 = vmatmul.mubr.f32.gmra.mrb[0].mxu0 %v485
      %v720 = vpop.f32.mrb[0].mxu0
      %v721 = vadd.f32 %v401, %v720
      %v722 = vpop.f32.mrb[0].mxu0
      %723 = vmatprep.mubr.f32.mxu0 0.0
      %724 = vmatmul.mubr.f32.gmra.mrb[0].mxu0 %v488
      %v725 = vpop.f32.mrb[0].mxu0
      %v726 = vadd.f32 %v402, %v725
      %v727 = vpop.f32.mrb[0].mxu0
      %728 = vmatprep.mubr.f32.mxu0 0.0
      %729 = vmatmul.mubr.f32.gmra.mrb[0].mxu0 %v491
      %v730 = vpop.f32.mrb[0].mxu0
      %v731 = vadd.f32 %v403, %v730
      %v732 = vpop.f32.mrb[0].mxu0
      %733 = vmatprep.mubr.f32.mxu0 0.0
      %734 = vmatmul.mubr.f32.gmra.mrb[0].mxu0 %v494
      %v735 = vpop.f32.mrb[0].mxu0
      %v736 = vadd.f32 %v404, %v735
      %v737 = vpop.f32.mrb[0].mxu0
      %738 = vmatprep.mubr.f32.mxu0 0.0
      %739 = vmatmul.mubr.f32.gmra.mrb[0].mxu0 %v497
      %v740 = vpop.f32.mrb[0].mxu0
      %v741 = vadd.f32 %v405, %v740
      %v742 = vpop.f32.mrb[0].mxu0
      %743 = vmatprep.mubr.f32.mxu0 0.0
      %744 = vmatmul.mubr.f32.gmra.mrb[0].mxu0 %v500
      %v745 = vpop.f32.mrb[0].mxu0
      %v746 = vadd.f32 %v406, %v745
      %v747 = vpop.f32.mrb[0].mxu0
      %748 = vmatprep.mubr.f32.mxu0 0.0
      %749 = vmatmul.mubr.f32.gmra.mrb[0].mxu0 %v503
      %v750 = vpop.f32.mrb[0].mxu0
      %v751 = vadd.f32 %v407, %v750
      %v752 = vpop.f32.mrb[0].mxu0
      %753 = vmatprep.mubr.f32.mxu0 0.0
      %754 = vmatmul.mubr.f32.gmra.mrb[0].mxu0 %v506
      %v755 = vpop.f32.mrb[0].mxu0
      %v756 = vadd.f32 %v408, %v755
      %v757 = vpop.f32.mrb[0].mxu0
      %758 = vmatprep.mubr.f32.mxu0 0.0
      %759 = vmatmul.mubr.f32.gmra.mrb[0].mxu0 %v509
      %v760 = vpop.f32.mrb[0].mxu0
      %v761 = vadd.f32 %v409, %v760
      %v762 = vpop.f32.mrb[0].mxu0
      %763 = vmatprep.mubr.f32.mxu0 0.0
      %764 = vmatmul.mubr.f32.gmra.mrb[0].mxu0 %v512
      %v765 = vpop.f32.mrb[0].mxu0
      %v766 = vadd.f32 %v410, %v765
      %v767 = vpop.f32.mrb[0].mxu0
      %768 = vmatprep.mubr.f32.mxu0 0.0
      %769 = vmatmul.mubr.f32.gmra.mrb[0].mxu0 %v515
      %v770 = vpop.f32.mrb[0].mxu0
      %v771 = vadd.f32 %v411, %v770
      %v772 = vpop.f32.mrb[0].mxu0
      %773 = vmatprep.mubr.f32.mxu0 0.0
      %774 = vmatmul.mubr.f32.gmra.mrb[0].mxu0 %v518
      %v775 = vpop.f32.mrb[0].mxu0
      %v776 = vadd.f32 %v412, %v775
      %v777 = vpop.f32.mrb[0].mxu0
      %778 = vmatprep.mubr.f32.mxu0 0.0
      %779 = vmatmul.mubr.f32.gmra.mrb[0].mxu0 %v521
      %v780 = vpop.f32.mrb[0].mxu0
      %v781 = vadd.f32 %v413, %v780
      %v782 = vpop.f32.mrb[0].mxu0
      %783 = vmatprep.mubr.f32.mxu0 0.0
      %784 = vmatmul.mubr.f32.gmra.mrb[0].mxu0 %v524
      %v785 = vpop.f32.mrb[0].mxu0
      %v786 = vadd.f32 %v414, %v785
      %v787 = vpop.f32.mrb[0].mxu0
      %788 = vmatprep.mubr.f32.mxu0 0.0
      %789 = vmatmul.mubr.f32.gmra.mrb[0].mxu0 %v527
      %v790 = vpop.f32.mrb[0].mxu0
      %v791 = vadd.f32 %v415, %v790
      %v792 = vpop.f32.mrb[0].mxu0
      %793 = vmatprep.mubr.f32.mxu0 0.0
      %794 = vmatmul.mubr.f32.gmra.mrb[0].mxu0 %v530
      %v795 = vpop.f32.mrb[0].mxu0
      %v796 = vadd.f32 %v416, %v795
      %v797 = vpop.f32.mrb[0].mxu0
      %798 = vmatprep.mubr.f32.mxu0 0.0
      %799 = vmatmul.mubr.f32.gmra.mrb[0].mxu0 %v533
      %v800 = vpop.f32.mrb[0].mxu0
      %v801 = vadd.f32 %v417, %v800
      %v802 = vpop.f32.mrb[0].mxu0
      %803 = vmatprep.mubr.f32.mxu0 0.0
      %804 = vmatmul.mubr.f32.gmra.mrb[0].mxu0 %v536
      %v805 = vpop.f32.mrb[0].mxu0
      %v806 = vadd.f32 %v418, %v805
      %v807 = vpop.f32.mrb[0].mxu0
      %808 = vmatprep.mubr.f32.mxu0 0.0
      %809 = vmatmul.mubr.f32.gmra.mrb[0].mxu0 %v539
      %v810 = vpop.f32.mrb[0].mxu0
      %v811 = vadd.f32 %v419, %v810
      %v812 = vpop.f32.mrb[0].mxu0
      %813 = vmatprep.mubr.f32.mxu0 0.0
      %814 = vmatmul.mubr.f32.gmra.mrb[0].mxu0 %v542
      %v815 = vpop.f32.mrb[0].mxu0
      %v816 = vadd.f32 %v420, %v815
      %v817 = vpop.f32.mrb[0].mxu0
      %818 = vmatprep.mubr.f32.mxu0 0.0
      %819 = vmatmul.mubr.f32.gmra.mrb[0].mxu0 %v545
      %v820 = vpop.f32.mrb[0].mxu0
      %v821 = vadd.f32 %v421, %v820
      %v822 = vpop.f32.mrb[0].mxu0
      %823 = vmatprep.mubr.f32.mxu0 0.0
      %824 = vmatmul.mubr.f32.gmra.mrb[0].mxu0 %v548
      %v825 = vpop.f32.mrb[0].mxu0
      %v826 = vadd.f32 %v422, %v825
      %v827 = vpop.f32.mrb[0].mxu0
      %828 = vdwg.mxu0
      %v829 = vxor.u32 %v621, 2147483648
      %v830 = vxor.u32 %v626, 2147483648
      %v831 = vxor.u32 %v631, 2147483648
      %v832 = vxor.u32 %v636, 2147483648
      %v833 = vxor.u32 %v641, 2147483648
      %v834 = vxor.u32 %v646, 2147483648
      %v835 = vxor.u32 %v651, 2147483648
      %v836 = vxor.u32 %v656, 2147483648
      %v837 = vxor.u32 %v661, 2147483648
      %v838 = vxor.u32 %v666, 2147483648
      %v839 = vxor.u32 %v671, 2147483648
      %v840 = vxor.u32 %v676, 2147483648
      %v841 = vxor.u32 %v681, 2147483648
      %v842 = vxor.u32 %v686, 2147483648
      %v843 = vxor.u32 %v691, 2147483648
      %v844 = vxor.u32 %v696, 2147483648
      %v845 = vxor.u32 %v701, 2147483648
      %v846 = vxor.u32 %v706, 2147483648
      %v847 = vxor.u32 %v711, 2147483648
      %v848 = vxor.u32 %v716, 2147483648
      %v849 = vxor.u32 %v721, 2147483648
      %v850 = vxor.u32 %v726, 2147483648
      %v851 = vxor.u32 %v731, 2147483648
      %v852 = vxor.u32 %v736, 2147483648
      %v853 = vxor.u32 %v741, 2147483648
      %v854 = vxor.u32 %v746, 2147483648
      %v855 = vxor.u32 %v751, 2147483648
      %v856 = vxor.u32 %v756, 2147483648
      %v857 = vxor.u32 %v761, 2147483648
      %v858 = vxor.u32 %v766, 2147483648
      %v859 = vxor.u32 %v771, 2147483648
      %v860 = vxor.u32 %v776, 2147483648
      %v861 = vxor.u32 %v781, 2147483648
      %v862 = vxor.u32 %v786, 2147483648
      %v863 = vxor.u32 %v791, 2147483648
      %v864 = vxor.u32 %v796, 2147483648
      %v865 = vxor.u32 %v801, 2147483648
      %v866 = vxor.u32 %v806, 2147483648
      %v867 = vxor.u32 %v811, 2147483648
      %v868 = vxor.u32 %v816, 2147483648
      %v869 = vxor.u32 %v821, 2147483648
      %v870 = vxor.u32 %v826, 2147483648
      %v871 = vmul.f32 %v829, 1.442695
      %v872 = vpow.pop %v871
      %v873 = vmul.f32 %v830, 1.442695
      %v874 = vpow.pop %v873
      %v875 = vmul.f32 %v831, 1.442695
      %v876 = vpow.pop %v875
      %v877 = vmul.f32 %v832, 1.442695
      %v878 = vpow.pop %v877
      %v879 = vmul.f32 %v833, 1.442695
      %v880 = vpow.pop %v879
      %v881 = vmul.f32 %v834, 1.442695
      %v882 = vpow.pop %v881
      %v883 = vmul.f32 %v835, 1.442695
      %v884 = vpow.pop %v883
      %v885 = vmul.f32 %v836, 1.442695
      %v886 = vpow.pop %v885
      %v887 = vmul.f32 %v837, 1.442695
      %v888 = vpow.pop %v887
      %v889 = vmul.f32 %v838, 1.442695
      %v890 = vpow.pop %v889
      %v891 = vmul.f32 %v839, 1.442695
      %v892 = vpow.pop %v891
      %v893 = vmul.f32 %v840, 1.442695
      %v894 = vpow.pop %v893
      %v895 = vmul.f32 %v841, 1.442695
      %v896 = vpow.pop %v895
      %v897 = vmul.f32 %v842, 1.442695
      %v898 = vpow.pop %v897
      %v899 = vmul.f32 %v843, 1.442695
      %v900 = vpow.pop %v899
      %v901 = vmul.f32 %v844, 1.442695
      %v902 = vpow.pop %v901
      %v903 = vmul.f32 %v845, 1.442695
      %v904 = vpow.pop %v903
      %v905 = vmul.f32 %v846, 1.442695
      %v906 = vpow.pop %v905
      %v907 = vmul.f32 %v847, 1.442695
      %v908 = vpow.pop %v907
      %v909 = vmul.f32 %v848, 1.442695
      %v910 = vpow.pop %v909
      %v911 = vmul.f32 %v849, 1.442695
      %v912 = vpow.pop %v911
      %v913 = vmul.f32 %v850, 1.442695
      %v914 = vpow.pop %v913
      %v915 = vmul.f32 %v851, 1.442695
      %v916 = vpow.pop %v915
      %v917 = vmul.f32 %v852, 1.442695
      %v918 = vpow.pop %v917
      %v919 = vmul.f32 %v853, 1.442695
      %v920 = vpow.pop %v919
      %v921 = vmul.f32 %v854, 1.442695
      %v922 = vpow.pop %v921
      %v923 = vmul.f32 %v855, 1.442695
      %v924 = vpow.pop %v923
      %v925 = vmul.f32 %v856, 1.442695
      %v926 = vpow.pop %v925
      %v927 = vmul.f32 %v857, 1.442695
      %v928 = vpow.pop %v927
      %v929 = vmul.f32 %v858, 1.442695
      %v930 = vpow.pop %v929
      %v931 = vmul.f32 %v859, 1.442695
      %v932 = vpow.pop %v931
      %v933 = vmul.f32 %v860, 1.442695
      %v934 = vpow.pop %v933
      %v935 = vmul.f32 %v861, 1.442695
      %v936 = vpow.pop %v935
      %v937 = vmul.f32 %v862, 1.442695
      %v938 = vpow.pop %v937
      %v939 = vmul.f32 %v863, 1.442695
      %v940 = vpow.pop %v939
      %v941 = vmul.f32 %v864, 1.442695
      %v942 = vpow.pop %v941
      %v943 = vmul.f32 %v865, 1.442695
      %v944 = vpow.pop %v943
      %v945 = vmul.f32 %v866, 1.442695
      %v946 = vpow.pop %v945
      %v947 = vmul.f32 %v867, 1.442695
      %v948 = vpow.pop %v947
      %v949 = vmul.f32 %v868, 1.442695
      %v950 = vpow.pop %v949
      %v951 = vmul.f32 %v869, 1.442695
      %v952 = vpow.pop %v951
      %v953 = vmul.f32 %v870, 1.442695
      %v954 = vpow.pop %v953
      %v955 = vadd.f32 %v872, 1.0
      %v956 = vadd.f32 %v874, 1.0
      %v957 = vadd.f32 %v876, 1.0
      %v958 = vadd.f32 %v878, 1.0
      %v959 = vadd.f32 %v880, 1.0
      %v960 = vadd.f32 %v882, 1.0
      %v961 = vadd.f32 %v884, 1.0
      %v962 = vadd.f32 %v886, 1.0
      %v963 = vadd.f32 %v888, 1.0
      %v964 = vadd.f32 %v890, 1.0
      %v965 = vadd.f32 %v892, 1.0
      %v966 = vadd.f32 %v894, 1.0
      %v967 = vadd.f32 %v896, 1.0
      %v968 = vadd.f32 %v898, 1.0
      %v969 = vadd.f32 %v900, 1.0
      %v970 = vadd.f32 %v902, 1.0
      %v971 = vadd.f32 %v904, 1.0
      %v972 = vadd.f32 %v906, 1.0
      %v973 = vadd.f32 %v908, 1.0
      %v974 = vadd.f32 %v910, 1.0
      %v975 = vadd.f32 %v912, 1.0
      %v976 = vadd.f32 %v914, 1.0
      %v977 = vadd.f32 %v916, 1.0
      %v978 = vadd.f32 %v918, 1.0
      %v979 = vadd.f32 %v920, 1.0
      %v980 = vadd.f32 %v922, 1.0
      %v981 = vadd.f32 %v924, 1.0
      %v982 = vadd.f32 %v926, 1.0
      %v983 = vadd.f32 %v928, 1.0
      %v984 = vadd.f32 %v930, 1.0
      %v985 = vadd.f32 %v932, 1.0
      %v986 = vadd.f32 %v934, 1.0
      %v987 = vadd.f32 %v936, 1.0
      %v988 = vadd.f32 %v938, 1.0
      %v989 = vadd.f32 %v940, 1.0
      %v990 = vadd.f32 %v942, 1.0
      %v991 = vadd.f32 %v944, 1.0
      %v992 = vadd.f32 %v946, 1.0
      %v993 = vadd.f32 %v948, 1.0
      %v994 = vadd.f32 %v950, 1.0
      %v995 = vadd.f32 %v952, 1.0
      %v996 = vadd.f32 %v954, 1.0
      %v997 = vrcp.pop %v955
      %v998 = vmul.f32 1.0, %v997
      %v999 = vrcp.pop %v956
      %v1000 = vmul.f32 1.0, %v999
      %v1001 = vrcp.pop %v957
      %v1002 = vmul.f32 1.0, %v1001
      %v1003 = vrcp.pop %v958
      %v1004 = vmul.f32 1.0, %v1003
      %v1005 = vrcp.pop %v959
      %v1006 = vmul.f32 1.0, %v1005
      %v1007 = vrcp.pop %v960
      %v1008 = vmul.f32 1.0, %v1007
      %v1009 = vrcp.pop %v961
      %v1010 = vmul.f32 1.0, %v1009
      %v1011 = vrcp.pop %v962
      %v1012 = vmul.f32 1.0, %v1011
      %v1013 = vrcp.pop %v963
      %v1014 = vmul.f32 1.0, %v1013
      %v1015 = vrcp.pop %v964
      %v1016 = vmul.f32 1.0, %v1015
      %v1017 = vrcp.pop %v965
      %v1018 = vmul.f32 1.0, %v1017
      %v1019 = vrcp.pop %v966
      %v1020 = vmul.f32 1.0, %v1019
      %v1021 = vrcp.pop %v967
      %v1022 = vmul.f32 1.0, %v1021
      %v1023 = vrcp.pop %v968
      %v1024 = vmul.f32 1.0, %v1023
      %v1025 = vrcp.pop %v969
      %v1026 = vmul.f32 1.0, %v1025
      %v1027 = vrcp.pop %v970
      %v1028 = vmul.f32 1.0, %v1027
      %v1029 = vrcp.pop %v971
      %v1030 = vmul.f32 1.0, %v1029
      %v1031 = vrcp.pop %v972
      %v1032 = vmul.f32 1.0, %v1031
      %v1033 = vrcp.pop %v973
      %v1034 = vmul.f32 1.0, %v1033
      %v1035 = vrcp.pop %v974
      %v1036 = vmul.f32 1.0, %v1035
      %v1037 = vrcp.pop %v975
      %v1038 = vmul.f32 1.0, %v1037
      %v1039 = vrcp.pop %v976
      %v1040 = vmul.f32 1.0, %v1039
      %v1041 = vrcp.pop %v977
      %v1042 = vmul.f32 1.0, %v1041
      %v1043 = vrcp.pop %v978
      %v1044 = vmul.f32 1.0, %v1043
      %v1045 = vrcp.pop %v979
      %v1046 = vmul.f32 1.0, %v1045
      %v1047 = vrcp.pop %v980
      %v1048 = vmul.f32 1.0, %v1047
      %v1049 = vrcp.pop %v981
      %v1050 = vmul.f32 1.0, %v1049
      %v1051 = vrcp.pop %v982
      %v1052 = vmul.f32 1.0, %v1051
      %v1053 = vrcp.pop %v983
      %v1054 = vmul.f32 1.0, %v1053
      %v1055 = vrcp.pop %v984
      %v1056 = vmul.f32 1.0, %v1055
      %v1057 = vrcp.pop %v985
      %v1058 = vmul.f32 1.0, %v1057
      %v1059 = vrcp.pop %v986
      %v1060 = vmul.f32 1.0, %v1059
      %v1061 = vrcp.pop %v987
      %v1062 = vmul.f32 1.0, %v1061
      %v1063 = vrcp.pop %v988
      %v1064 = vmul.f32 1.0, %v1063
      %v1065 = vrcp.pop %v989
      %v1066 = vmul.f32 1.0, %v1065
      %v1067 = vrcp.pop %v990
      %v1068 = vmul.f32 1.0, %v1067
      %v1069 = vrcp.pop %v991
      %v1070 = vmul.f32 1.0, %v1069
      %v1071 = vrcp.pop %v992
      %v1072 = vmul.f32 1.0, %v1071
      %v1073 = vrcp.pop %v993
      %v1074 = vmul.f32 1.0, %v1073
      %v1075 = vrcp.pop %v994
      %v1076 = vmul.f32 1.0, %v1075
      %v1077 = vrcp.pop %v995
      %v1078 = vmul.f32 1.0, %v1077
      %v1079 = vrcp.pop %v996
      %v1080 = vmul.f32 1.0, %v1079
      %v1081 = vld [vmem:[%s3] sm:$0xff]
      %v1082 = vld [vmem:[%s3 + $0x8] sm:$0xff]
      %v1083 = vld [vmem:[%s3 + $0x10] sm:$0xff]
      %v1084 = vld [vmem:[%s3 + $0x18] sm:$0xff]
      %v1085 = vld [vmem:[%s3 + $0x20] sm:$0xff]
      %v1086 = vld [vmem:[%s3 + $0x28] sm:$0xff]
      %v1087 = vld [vmem:[%s3 + $0x30] sm:$0xff]
      %v1088 = vld [vmem:[%s3 + $0x38] sm:$0xff]
      %v1089 = vld [vmem:[%s3 + $0x40] sm:$0xff]
      %v1090 = vld [vmem:[%s3 + $0x48] sm:$0xff]
      %v1091 = vld [vmem:[%s3 + $0x50] sm:$0xff]
      %v1092 = vld [vmem:[%s3 + $0x58] sm:$0xff]
      %v1093 = vld [vmem:[%s3 + $0x60] sm:$0xff]
      %v1094 = vld [vmem:[%s3 + $0x68] sm:$0xff]
      %v1095 = vld [vmem:[%s3 + $0x70] sm:$0xff]
      %v1096 = vld [vmem:[%s3 + $0x78] sm:$0xff]
      %v1097 = vld [vmem:[%s3 + $0x80] sm:$0xff]
      %v1098 = vld [vmem:[%s3 + $0x88] sm:$0xff]
      %v1099 = vld [vmem:[%s3 + $0x90] sm:$0xff]
      %v1100 = vld [vmem:[%s3 + $0x98] sm:$0xff]
      %v1101 = vld [vmem:[%s3 + $0xa0] sm:$0xff]
      %v1102 = vld [vmem:[%s3 + $0xa8] sm:$0xff]
      %v1103 = vld [vmem:[%s3 + $0xb0] sm:$0xff]
      %v1104 = vld [vmem:[%s3 + $0xb8] sm:$0xff]
      %v1105 = vld [vmem:[%s3 + $0xc0] sm:$0xff]
      %v1106 = vld [vmem:[%s3 + $0xc8] sm:$0xff]
      %v1107 = vld [vmem:[%s3 + $0xd0] sm:$0xff]
      %v1108 = vld [vmem:[%s3 + $0xd8] sm:$0xff]
      %v1109 = vld [vmem:[%s3 + $0xe0] sm:$0xff]
      %v1110 = vld [vmem:[%s3 + $0xe8] sm:$0xff]
      %v1111 = vld [vmem:[%s3 + $0xf0] sm:$0xff]
      %v1112 = vld [vmem:[%s3 + $0xf8] sm:$0xff]
      %v1113 = vld [vmem:[%s3 + $0x100] sm:$0xff]
      %v1114 = vld [vmem:[%s3 + $0x108] sm:$0xff]
      %v1115 = vld [vmem:[%s3 + $0x110] sm:$0xff]
      %v1116 = vld [vmem:[%s3 + $0x118] sm:$0xff]
      %v1117 = vld [vmem:[%s3 + $0x120] sm:$0xff]
      %v1118 = vld [vmem:[%s3 + $0x128] sm:$0xff]
      %v1119 = vld [vmem:[%s3 + $0x130] sm:$0xff]
      %v1120 = vld [vmem:[%s3 + $0x138] sm:$0xff]
      %v1121 = vld [vmem:[%s3 + $0x140] sm:$0xff]
      %v1122 = vld [vmem:[%s3 + $0x148] sm:$0xff]
      %v1123 = vld [vmem:[%s3 + $0x150] sm:$0xff]
      %v1124 = vld [vmem:[%s3 + $0x158] sm:$0xff]
      %v1125 = vld [vmem:[%s3 + $0x160] sm:$0xff]
      %v1126 = vld [vmem:[%s3 + $0x168] sm:$0xff]
      %v1127 = vld [vmem:[%s3 + $0x170] sm:$0xff]
      %v1128 = vld [vmem:[%s3 + $0x178] sm:$0xff]
      %v1129 = vld [vmem:[%s3 + $0x180] sm:$0xff]
      %v1130 = vld [vmem:[%s3 + $0x188] sm:$0xff]
      %v1131 = vld [vmem:[%s3 + $0x190] sm:$0xff]
      %v1132 = vld [vmem:[%s3 + $0x198] sm:$0xff]
      %v1133 = vld [vmem:[%s3 + $0x1a0] sm:$0xff]
      %v1134 = vld [vmem:[%s3 + $0x1a8] sm:$0xff]
      %v1135 = vld [vmem:[%s3 + $0x1b0] sm:$0xff]
      %v1136 = vld [vmem:[%s3 + $0x1b8] sm:$0xff]
      %v1137 = vld [vmem:[%s3 + $0x1c0] sm:$0xff]
      %v1138 = vld [vmem:[%s3 + $0x1c8] sm:$0xff]
      %v1139 = vld [vmem:[%s3 + $0x1d0] sm:$0xff]
      %v1140 = vld [vmem:[%s3 + $0x1d8] sm:$0xff]
      %v1141 = vld [vmem:[%s3 + $0x1e0] sm:$0xff]
      %v1142 = vld [vmem:[%s3 + $0x1e8] sm:$0xff]
      %v1143 = vld [vmem:[%s3 + $0x1f0] sm:$0xff]
      %v1144 = vld [vmem:[%s3 + $0x1f8] sm:$0xff]
      %v1145 = vld [vmem:[%s3 + $0x200] sm:$0xff]
      %v1146 = vld [vmem:[%s3 + $0x208] sm:$0xff]
      %v1147 = vld [vmem:[%s3 + $0x210] sm:$0xff]
      %v1148 = vld [vmem:[%s3 + $0x218] sm:$0xff]
      %v1149 = vld [vmem:[%s3 + $0x220] sm:$0xff]
      %v1150 = vld [vmem:[%s3 + $0x228] sm:$0xff]
      %v1151 = vld [vmem:[%s3 + $0x230] sm:$0xff]
      %v1152 = vld [vmem:[%s3 + $0x238] sm:$0xff]
      %v1153 = vld [vmem:[%s3 + $0x240] sm:$0xff]
      %v1154 = vld [vmem:[%s3 + $0x248] sm:$0xff]
      %v1155 = vld [vmem:[%s3 + $0x250] sm:$0xff]
      %v1156 = vld [vmem:[%s3 + $0x258] sm:$0xff]
      %v1157 = vld [vmem:[%s3 + $0x260] sm:$0xff]
      %v1158 = vld [vmem:[%s3 + $0x268] sm:$0xff]
      %v1159 = vld [vmem:[%s3 + $0x270] sm:$0xff]
      %v1160 = vld [vmem:[%s3 + $0x278] sm:$0xff]
      %v1161 = vld [vmem:[%s3 + $0x280] sm:$0xff]
      %v1162 = vld [vmem:[%s3 + $0x288] sm:$0xff]
      %v1163 = vld [vmem:[%s3 + $0x290] sm:$0xff]
      %v1164 = vld [vmem:[%s3 + $0x298] sm:$0xff]
      %1166 = vset.pattern.permute.xlu0 0
      %1167 = vperm.xlu0 %1166, %v998
      %v1168 = vpop.permute.xlu0 %1167
      %1171 = vset.pattern.permute.xlu0 0
      %1172 = vperm.xlu0 %1171, %v1000
      %v1173 = vpop.permute.xlu0 %1172
      %1176 = vset.pattern.permute.xlu0 0
      %1177 = vperm.xlu0 %1176, %v1002
      %v1178 = vpop.permute.xlu0 %1177
      %1181 = vset.pattern.permute.xlu0 0
      %1182 = vperm.xlu0 %1181, %v1004
      %v1183 = vpop.permute.xlu0 %1182
      %1186 = vset.pattern.permute.xlu0 0
      %1187 = vperm.xlu0 %1186, %v1006
      %v1188 = vpop.permute.xlu0 %1187
      %1191 = vset.pattern.permute.xlu0 0
      %1192 = vperm.xlu0 %1191, %v1008
      %v1193 = vpop.permute.xlu0 %1192
      %1196 = vset.pattern.permute.xlu0 0
      %1197 = vperm.xlu0 %1196, %v1010
      %v1198 = vpop.permute.xlu0 %1197
      %1201 = vset.pattern.permute.xlu0 0
      %1202 = vperm.xlu0 %1201, %v1012
      %v1203 = vpop.permute.xlu0 %1202
      %1206 = vset.pattern.permute.xlu0 0
      %1207 = vperm.xlu0 %1206, %v1014
      %v1208 = vpop.permute.xlu0 %1207
      %1211 = vset.pattern.permute.xlu0 0
      %1212 = vperm.xlu0 %1211, %v1016
      %v1213 = vpop.permute.xlu0 %1212
      %1216 = vset.pattern.permute.xlu0 0
      %1217 = vperm.xlu0 %1216, %v1018
      %v1218 = vpop.permute.xlu0 %1217
      %1221 = vset.pattern.permute.xlu0 0
      %1222 = vperm.xlu0 %1221, %v1020
      %v1223 = vpop.permute.xlu0 %1222
      %1226 = vset.pattern.permute.xlu0 0
      %1227 = vperm.xlu0 %1226, %v1022
      %v1228 = vpop.permute.xlu0 %1227
      %1231 = vset.pattern.permute.xlu0 0
      %1232 = vperm.xlu0 %1231, %v1024
      %v1233 = vpop.permute.xlu0 %1232
      %1236 = vset.pattern.permute.xlu0 0
      %1237 = vperm.xlu0 %1236, %v1026
      %v1238 = vpop.permute.xlu0 %1237
      %1241 = vset.pattern.permute.xlu0 0
      %1242 = vperm.xlu0 %1241, %v1028
      %v1243 = vpop.permute.xlu0 %1242
      %1246 = vset.pattern.permute.xlu0 0
      %1247 = vperm.xlu0 %1246, %v1030
      %v1248 = vpop.permute.xlu0 %1247
      %1251 = vset.pattern.permute.xlu0 0
      %1252 = vperm.xlu0 %1251, %v1032
      %v1253 = vpop.permute.xlu0 %1252
      %1256 = vset.pattern.permute.xlu0 0
      %1257 = vperm.xlu0 %1256, %v1034
      %v1258 = vpop.permute.xlu0 %1257
      %1261 = vset.pattern.permute.xlu0 0
      %1262 = vperm.xlu0 %1261, %v1036
      %v1263 = vpop.permute.xlu0 %1262
      %1266 = vset.pattern.permute.xlu0 0
      %1267 = vperm.xlu0 %1266, %v1038
      %v1268 = vpop.permute.xlu0 %1267
      %1271 = vset.pattern.permute.xlu0 0
      %1272 = vperm.xlu0 %1271, %v1040
      %v1273 = vpop.permute.xlu0 %1272
      %1276 = vset.pattern.permute.xlu0 0
      %1277 = vperm.xlu0 %1276, %v1042
      %v1278 = vpop.permute.xlu0 %1277
      %1281 = vset.pattern.permute.xlu0 0
      %1282 = vperm.xlu0 %1281, %v1044
      %v1283 = vpop.permute.xlu0 %1282
      %1286 = vset.pattern.permute.xlu0 0
      %1287 = vperm.xlu0 %1286, %v1046
      %v1288 = vpop.permute.xlu0 %1287
      %1291 = vset.pattern.permute.xlu0 0
      %1292 = vperm.xlu0 %1291, %v1048
      %v1293 = vpop.permute.xlu0 %1292
      %1296 = vset.pattern.permute.xlu0 0
      %1297 = vperm.xlu0 %1296, %v1050
      %v1298 = vpop.permute.xlu0 %1297
      %1301 = vset.pattern.permute.xlu0 0
      %1302 = vperm.xlu0 %1301, %v1052
      %v1303 = vpop.permute.xlu0 %1302
      %1306 = vset.pattern.permute.xlu0 0
      %1307 = vperm.xlu0 %1306, %v1054
      %v1308 = vpop.permute.xlu0 %1307
      %1311 = vset.pattern.permute.xlu0 0
      %1312 = vperm.xlu0 %1311, %v1056
      %v1313 = vpop.permute.xlu0 %1312
      %1316 = vset.pattern.permute.xlu0 0
      %1317 = vperm.xlu0 %1316, %v1058
      %v1318 = vpop.permute.xlu0 %1317
      %1321 = vset.pattern.permute.xlu0 0
      %1322 = vperm.xlu0 %1321, %v1060
      %v1323 = vpop.permute.xlu0 %1322
      %1326 = vset.pattern.permute.xlu0 0
      %1327 = vperm.xlu0 %1326, %v1062
      %v1328 = vpop.permute.xlu0 %1327
      %1331 = vset.pattern.permute.xlu0 0
      %1332 = vperm.xlu0 %1331, %v1064
      %v1333 = vpop.permute.xlu0 %1332
      %1336 = vset.pattern.permute.xlu0 0
      %1337 = vperm.xlu0 %1336, %v1066
      %v1338 = vpop.permute.xlu0 %1337
      %1341 = vset.pattern.permute.xlu0 0
      %1342 = vperm.xlu0 %1341, %v1068
      %v1343 = vpop.permute.xlu0 %1342
      %1346 = vset.pattern.permute.xlu0 0
      %1347 = vperm.xlu0 %1346, %v1070
      %v1348 = vpop.permute.xlu0 %1347
      %1351 = vset.pattern.permute.xlu0 0
      %1352 = vperm.xlu0 %1351, %v1072
      %v1353 = vpop.permute.xlu0 %1352
      %1356 = vset.pattern.permute.xlu0 0
      %1357 = vperm.xlu0 %1356, %v1074
      %v1358 = vpop.permute.xlu0 %1357
      %1361 = vset.pattern.permute.xlu0 0
      %1362 = vperm.xlu0 %1361, %v1076
      %v1363 = vpop.permute.xlu0 %1362
      %1366 = vset.pattern.permute.xlu0 0
      %1367 = vperm.xlu0 %1366, %v1078
      %v1368 = vpop.permute.xlu0 %1367
      %1371 = vset.pattern.permute.xlu0 0
      %1372 = vperm.xlu0 %1371, %v1080
      %v1373 = vpop.permute.xlu0 %1372
      %v1375 = vmul.f32 %v1081, %v1168
      %v1376 = vmul.f32 %v1082, %v1168
      %v1377 = vmul.f32 %v1083, %v1173
      %v1378 = vmul.f32 %v1084, %v1173
      %v1379 = vmul.f32 %v1085, %v1178
      %v1380 = vmul.f32 %v1086, %v1178
      %v1381 = vmul.f32 %v1087, %v1183
      %v1382 = vmul.f32 %v1088, %v1183
      %v1383 = vmul.f32 %v1089, %v1188
      %v1384 = vmul.f32 %v1090, %v1188
      %v1385 = vmul.f32 %v1091, %v1193
      %v1386 = vmul.f32 %v1092, %v1193
      %v1387 = vmul.f32 %v1093, %v1198
      %v1388 = vmul.f32 %v1094, %v1198
      %v1389 = vmul.f32 %v1095, %v1203
      %v1390 = vmul.f32 %v1096, %v1203
      %v1391 = vmul.f32 %v1097, %v1208
      %v1392 = vmul.f32 %v1098, %v1208
      %v1393 = vmul.f32 %v1099, %v1213
      %v1394 = vmul.f32 %v1100, %v1213
      %v1395 = vmul.f32 %v1101, %v1218
      %v1396 = vmul.f32 %v1102, %v1218
      %v1397 = vmul.f32 %v1103, %v1223
      %v1398 = vmul.f32 %v1104, %v1223
      %v1399 = vmul.f32 %v1105, %v1228
      %v1400 = vmul.f32 %v1106, %v1228
      %v1401 = vmul.f32 %v1107, %v1233
      %v1402 = vmul.f32 %v1108, %v1233
      %v1403 = vmul.f32 %v1109, %v1238
      %v1404 = vmul.f32 %v1110, %v1238
      %v1405 = vmul.f32 %v1111, %v1243
      %v1406 = vmul.f32 %v1112, %v1243
      %v1407 = vmul.f32 %v1113, %v1248
      %v1408 = vmul.f32 %v1114, %v1248
      %v1409 = vmul.f32 %v1115, %v1253
      %v1410 = vmul.f32 %v1116, %v1253
      %v1411 = vmul.f32 %v1117, %v1258
      %v1412 = vmul.f32 %v1118, %v1258
      %v1413 = vmul.f32 %v1119, %v1263
      %v1414 = vmul.f32 %v1120, %v1263
      %v1415 = vmul.f32 %v1121, %v1268
      %v1416 = vmul.f32 %v1122, %v1268
      %v1417 = vmul.f32 %v1123, %v1273
      %v1418 = vmul.f32 %v1124, %v1273
      %v1419 = vmul.f32 %v1125, %v1278
      %v1420 = vmul.f32 %v1126, %v1278
      %v1421 = vmul.f32 %v1127, %v1283
      %v1422 = vmul.f32 %v1128, %v1283
      %v1423 = vmul.f32 %v1129, %v1288
      %v1424 = vmul.f32 %v1130, %v1288
      %v1425 = vmul.f32 %v1131, %v1293
      %v1426 = vmul.f32 %v1132, %v1293
      %v1427 = vmul.f32 %v1133, %v1298
      %v1428 = vmul.f32 %v1134, %v1298
      %v1429 = vmul.f32 %v1135, %v1303
      %v1430 = vmul.f32 %v1136, %v1303
      %v1431 = vmul.f32 %v1137, %v1308
      %v1432 = vmul.f32 %v1138, %v1308
      %v1433 = vmul.f32 %v1139, %v1313
      %v1434 = vmul.f32 %v1140, %v1313
      %v1435 = vmul.f32 %v1141, %v1318
      %v1436 = vmul.f32 %v1142, %v1318
      %v1437 = vmul.f32 %v1143, %v1323
      %v1438 = vmul.f32 %v1144, %v1323
      %v1439 = vmul.f32 %v1145, %v1328
      %v1440 = vmul.f32 %v1146, %v1328
      %v1441 = vmul.f32 %v1147, %v1333
      %v1442 = vmul.f32 %v1148, %v1333
      %v1443 = vmul.f32 %v1149, %v1338
      %v1444 = vmul.f32 %v1150, %v1338
      %v1445 = vmul.f32 %v1151, %v1343
      %v1446 = vmul.f32 %v1152, %v1343
      %v1447 = vmul.f32 %v1153, %v1348
      %v1448 = vmul.f32 %v1154, %v1348
      %v1449 = vmul.f32 %v1155, %v1353
      %v1450 = vmul.f32 %v1156, %v1353
      %v1451 = vmul.f32 %v1157, %v1358
      %v1452 = vmul.f32 %v1158, %v1358
      %v1453 = vmul.f32 %v1159, %v1363
      %v1454 = vmul.f32 %v1160, %v1363
      %v1455 = vmul.f32 %v1161, %v1368
      %v1456 = vmul.f32 %v1162, %v1368
      %v1457 = vmul.f32 %v1163, %v1373
      %v1458 = vmul.f32 %v1164, %v1373
      %v1459 = vld [vmem:[%s310] sm:$0xff]
      %v1460 = vld [vmem:[%s310 + $0x8] sm:$0xff]
      %v1461 = vld [vmem:[%s310 + $0x10] sm:$0xff]
      %v1462 = vld [vmem:[%s310 + $0x18] sm:$0xff]
      %v1463 = vld [vmem:[%s310 + $0x20] sm:$0xff]
      %v1464 = vld [vmem:[%s310 + $0x28] sm:$0xff]
      %v1465 = vld [vmem:[%s310 + $0x30] sm:$0xff]
      %v1466 = vld [vmem:[%s310 + $0x38] sm:$0xff]
      %v1467 = vld [vmem:[%s310 + $0x40] sm:$0xff]
      %v1468 = vld [vmem:[%s310 + $0x48] sm:$0xff]
      %v1469 = vld [vmem:[%s310 + $0x50] sm:$0xff]
      %v1470 = vld [vmem:[%s310 + $0x58] sm:$0xff]
      %v1471 = vld [vmem:[%s310 + $0x60] sm:$0xff]
      %v1472 = vld [vmem:[%s310 + $0x68] sm:$0xff]
      %v1473 = vld [vmem:[%s310 + $0x70] sm:$0xff]
      %v1474 = vld [vmem:[%s310 + $0x78] sm:$0xff]
      %v1475 = vld [vmem:[%s310 + $0x80] sm:$0xff]
      %v1476 = vld [vmem:[%s310 + $0x88] sm:$0xff]
      %v1477 = vld [vmem:[%s310 + $0x90] sm:$0xff]
      %v1478 = vld [vmem:[%s310 + $0x98] sm:$0xff]
      %v1479 = vld [vmem:[%s310 + $0xa0] sm:$0xff]
      %v1480 = vld [vmem:[%s310 + $0xa8] sm:$0xff]
      %v1481 = vld [vmem:[%s310 + $0xb0] sm:$0xff]
      %v1482 = vld [vmem:[%s310 + $0xb8] sm:$0xff]
      %v1483 = vld [vmem:[%s310 + $0xc0] sm:$0xff]
      %v1484 = vld [vmem:[%s310 + $0xc8] sm:$0xff]
      %v1485 = vld [vmem:[%s310 + $0xd0] sm:$0xff]
      %v1486 = vld [vmem:[%s310 + $0xd8] sm:$0xff]
      %v1487 = vld [vmem:[%s310 + $0xe0] sm:$0xff]
      %v1488 = vld [vmem:[%s310 + $0xe8] sm:$0xff]
      %v1489 = vld [vmem:[%s310 + $0xf0] sm:$0xff]
      %v1490 = vld [vmem:[%s310 + $0xf8] sm:$0xff]
      %v1491 = vld [vmem:[%s310 + $0x100] sm:$0xff]
      %v1492 = vld [vmem:[%s310 + $0x108] sm:$0xff]
      %v1493 = vld [vmem:[%s310 + $0x110] sm:$0xff]
      %v1494 = vld [vmem:[%s310 + $0x118] sm:$0xff]
      %v1495 = vld [vmem:[%s310 + $0x120] sm:$0xff]
      %v1496 = vld [vmem:[%s310 + $0x128] sm:$0xff]
      %v1497 = vld [vmem:[%s310 + $0x130] sm:$0xff]
      %v1498 = vld [vmem:[%s310 + $0x138] sm:$0xff]
      %v1499 = vld [vmem:[%s310 + $0x140] sm:$0xff]
      %v1500 = vld [vmem:[%s310 + $0x148] sm:$0xff]
      %v1501 = vld [vmem:[%s310 + $0x150] sm:$0xff]
      %v1502 = vld [vmem:[%s310 + $0x158] sm:$0xff]
      %v1503 = vld [vmem:[%s310 + $0x160] sm:$0xff]
      %v1504 = vld [vmem:[%s310 + $0x168] sm:$0xff]
      %v1505 = vld [vmem:[%s310 + $0x170] sm:$0xff]
      %v1506 = vld [vmem:[%s310 + $0x178] sm:$0xff]
      %v1507 = vld [vmem:[%s310 + $0x180] sm:$0xff]
      %v1508 = vld [vmem:[%s310 + $0x188] sm:$0xff]
      %v1509 = vld [vmem:[%s310 + $0x190] sm:$0xff]
      %v1510 = vld [vmem:[%s310 + $0x198] sm:$0xff]
      %v1511 = vld [vmem:[%s310 + $0x1a0] sm:$0xff]
      %v1512 = vld [vmem:[%s310 + $0x1a8] sm:$0xff]
      %v1513 = vld [vmem:[%s310 + $0x1b0] sm:$0xff]
      %v1514 = vld [vmem:[%s310 + $0x1b8] sm:$0xff]
      %v1515 = vld [vmem:[%s310 + $0x1c0] sm:$0xff]
      %v1516 = vld [vmem:[%s310 + $0x1c8] sm:$0xff]
      %v1517 = vld [vmem:[%s310 + $0x1d0] sm:$0xff]
      %v1518 = vld [vmem:[%s310 + $0x1d8] sm:$0xff]
      %v1519 = vld [vmem:[%s310 + $0x1e0] sm:$0xff]
      %v1520 = vld [vmem:[%s310 + $0x1e8] sm:$0xff]
      %v1521 = vld [vmem:[%s310 + $0x1f0] sm:$0xff]
      %vm1522 = vcmask 654336
      %v1524 = vsel %vm1522, %v1461, 0
      %v1527 = vsel %vm1522, %v1464, 0
      %v1530 = vsel %vm1522, %v1467, 0
      %v1533 = vsel %vm1522, %v1470, 0
      %v1536 = vsel %vm1522, %v1473, 0
      %v1539 = vsel %vm1522, %v1476, 0
      %v1542 = vsel %vm1522, %v1479, 0
      %v1545 = vsel %vm1522, %v1482, 0
      %v1548 = vsel %vm1522, %v1485, 0
      %v1551 = vsel %vm1522, %v1488, 0
      %v1554 = vsel %vm1522, %v1491, 0
      %v1557 = vsel %vm1522, %v1494, 0
      %v1560 = vsel %vm1522, %v1497, 0
      %v1563 = vsel %vm1522, %v1500, 0
      %v1566 = vsel %vm1522, %v1503, 0
      %v1569 = vsel %vm1522, %v1506, 0
      %v1572 = vsel %vm1522, %v1509, 0
      %v1575 = vsel %vm1522, %v1512, 0
      %v1578 = vsel %vm1522, %v1515, 0
      %v1581 = vsel %vm1522, %v1518, 0
      %v1584 = vsel %vm1522, %v1521, 0
      %1586 = vmatprep.subr.mxu0 %v1376
      %1587 = vmatpush1.msra.mxu0 %v1375
      %1588 = vmatprep.subr.mxu0 %v1378
      %1589 = vmatpush1.msra.mxu0 %v1377
      %1590 = vmatprep.subr.mxu0 %v1380
      %1591 = vmatpush1.msra.mxu0 %v1379
      %1592 = vmatprep.subr.mxu0 %v1382
      %1593 = vmatpush1.msra.mxu0 %v1381
      %1594 = vmatprep.subr.mxu0 %v1384
      %1595 = vmatpush1.msra.mxu0 %v1383
      %1596 = vmatprep.subr.mxu0 %v1386
      %1597 = vmatpush1.msra.mxu0 %v1385
      %1598 = vmatprep.subr.mxu0 %v1388
      %1599 = vmatpush1.msra.mxu0 %v1387
      %1600 = vmatprep.subr.mxu0 %v1390
      %1601 = vmatpush1.msra.mxu0 %v1389
      %1602 = vmatprep.subr.mxu0 %v1392
      %1603 = vmatpush1.msra.mxu0 %v1391
      %1604 = vmatprep.subr.mxu0 %v1394
      %1605 = vmatpush1.msra.mxu0 %v1393
      %1606 = vmatprep.subr.mxu0 %v1396
      %1607 = vmatpush1.msra.mxu0 %v1395
      %1608 = vmatprep.subr.mxu0 %v1398
      %1609 = vmatpush1.msra.mxu0 %v1397
      %1610 = vmatprep.subr.mxu0 %v1400
      %1611 = vmatpush1.msra.mxu0 %v1399
      %1612 = vmatprep.subr.mxu0 %v1402
      %1613 = vmatpush1.msra.mxu0 %v1401
      %1614 = vmatprep.subr.mxu0 %v1404
      %1615 = vmatpush1.msra.mxu0 %v1403
      %1616 = vmatprep.subr.mxu0 %v1406
      %1617 = vmatpush1.msra.mxu0 %v1405
      %1618 = vmatprep.subr.mxu0 %v1408
      %1619 = vmatpush1.msra.mxu0 %v1407
      %1620 = vmatprep.subr.mxu0 %v1410
      %1621 = vmatpush1.msra.mxu0 %v1409
      %1622 = vmatprep.subr.mxu0 %v1412
      %1623 = vmatpush1.msra.mxu0 %v1411
      %1624 = vmatprep.subr.mxu0 %v1414
      %1625 = vmatpush1.msra.mxu0 %v1413
      %1626 = vmatprep.subr.mxu0 %v1416
      %1627 = vmatpush1.msra.mxu0 %v1415
      %1628 = vmatprep.subr.mxu0 %v1418
      %1629 = vmatpush1.msra.mxu0 %v1417
      %1630 = vmatprep.subr.mxu0 %v1420
      %1631 = vmatpush1.msra.mxu0 %v1419
      %1632 = vmatprep.subr.mxu0 %v1422
      %1633 = vmatpush1.msra.mxu0 %v1421
      %1634 = vmatprep.subr.mxu0 %v1424
      %1635 = vmatpush1.msra.mxu0 %v1423
      %1636 = vmatprep.subr.mxu0 %v1426
      %1637 = vmatpush1.msra.mxu0 %v1425
      %1638 = vmatprep.subr.mxu0 %v1428
      %1639 = vmatpush1.msra.mxu0 %v1427
      %1640 = vmatprep.subr.mxu0 %v1430
      %1641 = vmatpush1.msra.mxu0 %v1429
      %1642 = vmatprep.subr.mxu0 %v1432
      %1643 = vmatpush1.msra.mxu0 %v1431
      %1644 = vmatprep.subr.mxu0 %v1434
      %1645 = vmatpush1.msra.mxu0 %v1433
      %1646 = vmatprep.subr.mxu0 %v1436
      %1647 = vmatpush1.msra.mxu0 %v1435
      %1648 = vmatprep.subr.mxu0 %v1438
      %1649 = vmatpush1.msra.mxu0 %v1437
      %1650 = vmatprep.mubr.f32.mxu0 %v1460
      %1651 = vmatmul.mubr.f32.gmra.mrb[0].mxu0 %v1459
      %v1652 = vpop.f32.mrb[0].mxu0
      %v1653 = vadd.f32 0.0, %v1652
      %v1654 = vpop.f32.mrb[0].mxu0
      %v1655 = vadd.f32 0.0, %v1654
      %1656 = vmatprep.mubr.f32.mxu0 %v1463
      %1657 = vmatmul.mubr.f32.gmra.mrb[0].mxu0 %v1462
      %v1658 = vpop.f32.mrb[0].mxu0
      %v1659 = vadd.f32 0.0, %v1658
      %v1660 = vpop.f32.mrb[0].mxu0
      %v1661 = vadd.f32 0.0, %v1660
      %1662 = vmatprep.mubr.f32.mxu0 %v1466
      %1663 = vmatmul.mubr.f32.gmra.mrb[0].mxu0 %v1465
      %v1664 = vpop.f32.mrb[0].mxu0
      %v1665 = vadd.f32 0.0, %v1664
      %v1666 = vpop.f32.mrb[0].mxu0
      %v1667 = vadd.f32 0.0, %v1666
      %1668 = vmatprep.mubr.f32.mxu0 %v1469
      %1669 = vmatmul.mubr.f32.gmra.mrb[0].mxu0 %v1468
      %v1670 = vpop.f32.mrb[0].mxu0
      %v1671 = vadd.f32 0.0, %v1670
      %v1672 = vpop.f32.mrb[0].mxu0
      %v1673 = vadd.f32 0.0, %v1672
      %1674 = vmatprep.mubr.f32.mxu0 %v1472
      %1675 = vmatmul.mubr.f32.gmra.mrb[0].mxu0 %v1471
      %v1676 = vpop.f32.mrb[0].mxu0
      %v1677 = vadd.f32 0.0, %v1676
      %v1678 = vpop.f32.mrb[0].mxu0
      %v1679 = vadd.f32 0.0, %v1678
      %1680 = vmatprep.mubr.f32.mxu0 %v1475
      %1681 = vmatmul.mubr.f32.gmra.mrb[0].mxu0 %v1474
      %v1682 = vpop.f32.mrb[0].mxu0
      %v1683 = vadd.f32 0.0, %v1682
      %v1684 = vpop.f32.mrb[0].mxu0
      %v1685 = vadd.f32 0.0, %v1684
      %1686 = vmatprep.mubr.f32.mxu0 %v1478
      %1687 = vmatmul.mubr.f32.gmra.mrb[0].mxu0 %v1477
      %v1688 = vpop.f32.mrb[0].mxu0
      %v1689 = vadd.f32 0.0, %v1688
      %v1690 = vpop.f32.mrb[0].mxu0
      %v1691 = vadd.f32 0.0, %v1690
      %1692 = vmatprep.mubr.f32.mxu0 %v1481
      %1693 = vmatmul.mubr.f32.gmra.mrb[0].mxu0 %v1480
      %v1694 = vpop.f32.mrb[0].mxu0
      %v1695 = vadd.f32 0.0, %v1694
      %v1696 = vpop.f32.mrb[0].mxu0
      %v1697 = vadd.f32 0.0, %v1696
      %1698 = vmatprep.mubr.f32.mxu0 %v1484
      %1699 = vmatmul.mubr.f32.gmra.mrb[0].mxu0 %v1483
      %v1700 = vpop.f32.mrb[0].mxu0
      %v1701 = vadd.f32 0.0, %v1700
      %v1702 = vpop.f32.mrb[0].mxu0
      %v1703 = vadd.f32 0.0, %v1702
      %1704 = vmatprep.mubr.f32.mxu0 %v1487
      %1705 = vmatmul.mubr.f32.gmra.mrb[0].mxu0 %v1486
      %v1706 = vpop.f32.mrb[0].mxu0
      %v1707 = vadd.f32 0.0, %v1706
      %v1708 = vpop.f32.mrb[0].mxu0
      %v1709 = vadd.f32 0.0, %v1708
      %1710 = vmatprep.mubr.f32.mxu0 %v1490
      %1711 = vmatmul.mubr.f32.gmra.mrb[0].mxu0 %v1489
      %v1712 = vpop.f32.mrb[0].mxu0
      %v1713 = vadd.f32 0.0, %v1712
      %v1714 = vpop.f32.mrb[0].mxu0
      %v1715 = vadd.f32 0.0, %v1714
      %1716 = vmatprep.mubr.f32.mxu0 %v1493
      %1717 = vmatmul.mubr.f32.gmra.mrb[0].mxu0 %v1492
      %v1718 = vpop.f32.mrb[0].mxu0
      %v1719 = vadd.f32 0.0, %v1718
      %v1720 = vpop.f32.mrb[0].mxu0
      %v1721 = vadd.f32 0.0, %v1720
      %1722 = vmatprep.mubr.f32.mxu0 %v1496
      %1723 = vmatmul.mubr.f32.gmra.mrb[0].mxu0 %v1495
      %v1724 = vpop.f32.mrb[0].mxu0
      %v1725 = vadd.f32 0.0, %v1724
      %v1726 = vpop.f32.mrb[0].mxu0
      %v1727 = vadd.f32 0.0, %v1726
      %1728 = vmatprep.mubr.f32.mxu0 %v1499
      %1729 = vmatmul.mubr.f32.gmra.mrb[0].mxu0 %v1498
      %v1730 = vpop.f32.mrb[0].mxu0
      %v1731 = vadd.f32 0.0, %v1730
      %v1732 = vpop.f32.mrb[0].mxu0
      %v1733 = vadd.f32 0.0, %v1732
      %1734 = vmatprep.mubr.f32.mxu0 %v1502
      %1735 = vmatmul.mubr.f32.gmra.mrb[0].mxu0 %v1501
      %v1736 = vpop.f32.mrb[0].mxu0
      %v1737 = vadd.f32 0.0, %v1736
      %v1738 = vpop.f32.mrb[0].mxu0
      %v1739 = vadd.f32 0.0, %v1738
      %1740 = vmatprep.mubr.f32.mxu0 %v1505
      %1741 = vmatmul.mubr.f32.gmra.mrb[0].mxu0 %v1504
      %v1742 = vpop.f32.mrb[0].mxu0
      %v1743 = vadd.f32 0.0, %v1742
      %v1744 = vpop.f32.mrb[0].mxu0
      %v1745 = vadd.f32 0.0, %v1744
      %1746 = vmatprep.mubr.f32.mxu0 %v1508
      %1747 = vmatmul.mubr.f32.gmra.mrb[0].mxu0 %v1507
      %v1748 = vpop.f32.mrb[0].mxu0
      %v1749 = vadd.f32 0.0, %v1748
      %v1750 = vpop.f32.mrb[0].mxu0
      %v1751 = vadd.f32 0.0, %v1750
      %1752 = vmatprep.mubr.f32.mxu0 %v1511
      %1753 = vmatmul.mubr.f32.gmra.mrb[0].mxu0 %v1510
      %v1754 = vpop.f32.mrb[0].mxu0
      %v1755 = vadd.f32 0.0, %v1754
      %v1756 = vpop.f32.mrb[0].mxu0
      %v1757 = vadd.f32 0.0, %v1756
      %1758 = vmatprep.mubr.f32.mxu0 %v1514
      %1759 = vmatmul.mubr.f32.gmra.mrb[0].mxu0 %v1513
      %v1760 = vpop.f32.mrb[0].mxu0
      %v1761 = vadd.f32 0.0, %v1760
      %v1762 = vpop.f32.mrb[0].mxu0
      %v1763 = vadd.f32 0.0, %v1762
      %1764 = vmatprep.mubr.f32.mxu0 %v1517
      %1765 = vmatmul.mubr.f32.gmra.mrb[0].mxu0 %v1516
      %v1766 = vpop.f32.mrb[0].mxu0
      %v1767 = vadd.f32 0.0, %v1766
      %v1768 = vpop.f32.mrb[0].mxu0
      %v1769 = vadd.f32 0.0, %v1768
      %1770 = vmatprep.mubr.f32.mxu0 %v1520
      %1771 = vmatmul.mubr.f32.gmra.mrb[0].mxu0 %v1519
      %v1772 = vpop.f32.mrb[0].mxu0
      %v1773 = vadd.f32 0.0, %v1772
      %v1774 = vpop.f32.mrb[0].mxu0
      %v1775 = vadd.f32 0.0, %v1774
      %1776 = vdwg.mxu0
      %1777 = vmatprep.subr.mxu0 %v1440
      %1778 = vmatpush1.msra.mxu0 %v1439
      %1779 = vmatprep.subr.mxu0 %v1442
      %1780 = vmatpush1.msra.mxu0 %v1441
      %1781 = vmatprep.subr.mxu0 %v1444
      %1782 = vmatpush1.msra.mxu0 %v1443
      %1783 = vmatprep.subr.mxu0 %v1446
      %1784 = vmatpush1.msra.mxu0 %v1445
      %1785 = vmatprep.subr.mxu0 %v1448
      %1786 = vmatpush1.msra.mxu0 %v1447
      %1787 = vmatprep.subr.mxu0 %v1450
      %1788 = vmatpush1.msra.mxu0 %v1449
      %1789 = vmatprep.subr.mxu0 %v1452
      %1790 = vmatpush1.msra.mxu0 %v1451
      %1791 = vmatprep.subr.mxu0 %v1454
      %1792 = vmatpush1.msra.mxu0 %v1453
      %1793 = vmatprep.subr.mxu0 %v1456
      %1794 = vmatpush1.msra.mxu0 %v1455
      %1795 = vmatprep.subr.mxu0 %v1458
      %1796 = vmatpush1.msra.mxu0 %v1457
      %1797 = vmatprep.subr.mxu0 0.0
      %1798 = vmatpush1.msra.mxu0 0.0
      %1799 = vmatprep.subr.mxu0 0.0
      %1800 = vmatpush1.msra.mxu0 0.0
      %1801 = vmatprep.subr.mxu0 0.0
      %1802 = vmatpush1.msra.mxu0 0.0
      %1803 = vmatprep.subr.mxu0 0.0
      %1804 = vmatpush1.msra.mxu0 0.0
      %1805 = vmatprep.subr.mxu0 0.0
      %1806 = vmatpush1.msra.mxu0 0.0
      %1807 = vmatprep.subr.mxu0 0.0
      %1808 = vmatpush1.msra.mxu0 0.0
      %1809 = vmatprep.subr.mxu0 0.0
      %1810 = vmatpush1.msra.mxu0 0.0
      %1811 = vmatprep.subr.mxu0 0.0
      %1812 = vmatpush1.msra.mxu0 0.0
      %1813 = vmatprep.subr.mxu0 0.0
      %1814 = vmatpush1.msra.mxu0 0.0
      %1815 = vmatprep.subr.mxu0 0.0
      %1816 = vmatpush1.msra.mxu0 0.0
      %1817 = vmatprep.subr.mxu0 0.0
      %1818 = vmatpush1.msra.mxu0 0.0
      %1819 = vmatprep.subr.mxu0 0.0
      %1820 = vmatpush1.msra.mxu0 0.0
      %1821 = vmatprep.subr.mxu0 0.0
      %1822 = vmatpush1.msra.mxu0 0.0
      %1823 = vmatprep.subr.mxu0 0.0
      %1824 = vmatpush1.msra.mxu0 0.0
      %1825 = vmatprep.subr.mxu0 0.0
      %1826 = vmatpush1.msra.mxu0 0.0
      %1827 = vmatprep.subr.mxu0 0.0
      %1828 = vmatpush1.msra.mxu0 0.0
      %1829 = vmatprep.subr.mxu0 0.0
      %1830 = vmatpush1.msra.mxu0 0.0
      %1831 = vmatprep.subr.mxu0 0.0
      %1832 = vmatpush1.msra.mxu0 0.0
      %1833 = vmatprep.subr.mxu0 0.0
      %1834 = vmatpush1.msra.mxu0 0.0
      %1835 = vmatprep.subr.mxu0 0.0
      %1836 = vmatpush1.msra.mxu0 0.0
      %1837 = vmatprep.subr.mxu0 0.0
      %1838 = vmatpush1.msra.mxu0 0.0
      %1839 = vmatprep.subr.mxu0 0.0
      %1840 = vmatpush1.msra.mxu0 0.0
      %1841 = vmatprep.mubr.f32.mxu0 0.0
      %1842 = vmatmul.mubr.f32.gmra.mrb[0].mxu0 %v1524
      %v1843 = vpop.f32.mrb[0].mxu0
      %v1844 = vadd.f32 %v1653, %v1843
      %v1845 = vpop.f32.mrb[0].mxu0
      %v1846 = vadd.f32 %v1655, %v1845
      %1847 = vmatprep.mubr.f32.mxu0 0.0
      %1848 = vmatmul.mubr.f32.gmra.mrb[0].mxu0 %v1527
      %v1849 = vpop.f32.mrb[0].mxu0
      %v1850 = vadd.f32 %v1659, %v1849
      %v1851 = vpop.f32.mrb[0].mxu0
      %v1852 = vadd.f32 %v1661, %v1851
      %1853 = vmatprep.mubr.f32.mxu0 0.0
      %1854 = vmatmul.mubr.f32.gmra.mrb[0].mxu0 %v1530
      %v1855 = vpop.f32.mrb[0].mxu0
      %v1856 = vadd.f32 %v1665, %v1855
      %v1857 = vpop.f32.mrb[0].mxu0
      %v1858 = vadd.f32 %v1667, %v1857
      %1859 = vmatprep.mubr.f32.mxu0 0.0
      %1860 = vmatmul.mubr.f32.gmra.mrb[0].mxu0 %v1533
      %v1861 = vpop.f32.mrb[0].mxu0
      %v1862 = vadd.f32 %v1671, %v1861
      %v1863 = vpop.f32.mrb[0].mxu0
      %v1864 = vadd.f32 %v1673, %v1863
      %1865 = vmatprep.mubr.f32.mxu0 0.0
      %1866 = vmatmul.mubr.f32.gmra.mrb[0].mxu0 %v1536
      %v1867 = vpop.f32.mrb[0].mxu0
      %v1868 = vadd.f32 %v1677, %v1867
      %v1869 = vpop.f32.mrb[0].mxu0
      %v1870 = vadd.f32 %v1679, %v1869
      %1871 = vmatprep.mubr.f32.mxu0 0.0
      %1872 = vmatmul.mubr.f32.gmra.mrb[0].mxu0 %v1539
      %v1873 = vpop.f32.mrb[0].mxu0
      %v1874 = vadd.f32 %v1683, %v1873
      %v1875 = vpop.f32.mrb[0].mxu0
      %v1876 = vadd.f32 %v1685, %v1875
      %1877 = vmatprep.mubr.f32.mxu0 0.0
      %1878 = vmatmul.mubr.f32.gmra.mrb[0].mxu0 %v1542
      %v1879 = vpop.f32.mrb[0].mxu0
      %v1880 = vadd.f32 %v1689, %v1879
      %v1881 = vpop.f32.mrb[0].mxu0
      %v1882 = vadd.f32 %v1691, %v1881
      %1883 = vmatprep.mubr.f32.mxu0 0.0
      %1884 = vmatmul.mubr.f32.gmra.mrb[0].mxu0 %v1545
      %v1885 = vpop.f32.mrb[0].mxu0
      %v1886 = vadd.f32 %v1695, %v1885
      %v1887 = vpop.f32.mrb[0].mxu0
      %v1888 = vadd.f32 %v1697, %v1887
      %1889 = vmatprep.mubr.f32.mxu0 0.0
      %1890 = vmatmul.mubr.f32.gmra.mrb[0].mxu0 %v1548
      %v1891 = vpop.f32.mrb[0].mxu0
      %v1892 = vadd.f32 %v1701, %v1891
      %v1893 = vpop.f32.mrb[0].mxu0
      %v1894 = vadd.f32 %v1703, %v1893
      %1895 = vmatprep.mubr.f32.mxu0 0.0
      %1896 = vmatmul.mubr.f32.gmra.mrb[0].mxu0 %v1551
      %v1897 = vpop.f32.mrb[0].mxu0
      %v1898 = vadd.f32 %v1707, %v1897
      %v1899 = vpop.f32.mrb[0].mxu0
      %v1900 = vadd.f32 %v1709, %v1899
      %1901 = vmatprep.mubr.f32.mxu0 0.0
      %1902 = vmatmul.mubr.f32.gmra.mrb[0].mxu0 %v1554
      %v1903 = vpop.f32.mrb[0].mxu0
      %v1904 = vadd.f32 %v1713, %v1903
      %v1905 = vpop.f32.mrb[0].mxu0
      %v1906 = vadd.f32 %v1715, %v1905
      %1907 = vmatprep.mubr.f32.mxu0 0.0
      %1908 = vmatmul.mubr.f32.gmra.mrb[0].mxu0 %v1557
      %v1909 = vpop.f32.mrb[0].mxu0
      %v1910 = vadd.f32 %v1719, %v1909
      %v1911 = vpop.f32.mrb[0].mxu0
      %v1912 = vadd.f32 %v1721, %v1911
      %1913 = vmatprep.mubr.f32.mxu0 0.0
      %1914 = vmatmul.mubr.f32.gmra.mrb[0].mxu0 %v1560
      %v1915 = vpop.f32.mrb[0].mxu0
      %v1916 = vadd.f32 %v1725, %v1915
      %v1917 = vpop.f32.mrb[0].mxu0
      %v1918 = vadd.f32 %v1727, %v1917
      %1919 = vmatprep.mubr.f32.mxu0 0.0
      %1920 = vmatmul.mubr.f32.gmra.mrb[0].mxu0 %v1563
      %v1921 = vpop.f32.mrb[0].mxu0
      %v1922 = vadd.f32 %v1731, %v1921
      %v1923 = vpop.f32.mrb[0].mxu0
      %v1924 = vadd.f32 %v1733, %v1923
      %1925 = vmatprep.mubr.f32.mxu0 0.0
      %1926 = vmatmul.mubr.f32.gmra.mrb[0].mxu0 %v1566
      %v1927 = vpop.f32.mrb[0].mxu0
      %v1928 = vadd.f32 %v1737, %v1927
      %v1929 = vpop.f32.mrb[0].mxu0
      %v1930 = vadd.f32 %v1739, %v1929
      %1931 = vmatprep.mubr.f32.mxu0 0.0
      %1932 = vmatmul.mubr.f32.gmra.mrb[0].mxu0 %v1569
      %v1933 = vpop.f32.mrb[0].mxu0
      %v1934 = vadd.f32 %v1743, %v1933
      %v1935 = vpop.f32.mrb[0].mxu0
      %v1936 = vadd.f32 %v1745, %v1935
      %1937 = vmatprep.mubr.f32.mxu0 0.0
      %1938 = vmatmul.mubr.f32.gmra.mrb[0].mxu0 %v1572
      %v1939 = vpop.f32.mrb[0].mxu0
      %v1940 = vadd.f32 %v1749, %v1939
      %v1941 = vpop.f32.mrb[0].mxu0
      %v1942 = vadd.f32 %v1751, %v1941
      %1943 = vmatprep.mubr.f32.mxu0 0.0
      %1944 = vmatmul.mubr.f32.gmra.mrb[0].mxu0 %v1575
      %v1945 = vpop.f32.mrb[0].mxu0
      %v1946 = vadd.f32 %v1755, %v1945
      %v1947 = vpop.f32.mrb[0].mxu0
      %v1948 = vadd.f32 %v1757, %v1947
      %1949 = vmatprep.mubr.f32.mxu0 0.0
      %1950 = vmatmul.mubr.f32.gmra.mrb[0].mxu0 %v1578
      %v1951 = vpop.f32.mrb[0].mxu0
      %v1952 = vadd.f32 %v1761, %v1951
      %v1953 = vpop.f32.mrb[0].mxu0
      %v1954 = vadd.f32 %v1763, %v1953
      %1955 = vmatprep.mubr.f32.mxu0 0.0
      %1956 = vmatmul.mubr.f32.gmra.mrb[0].mxu0 %v1581
      %v1957 = vpop.f32.mrb[0].mxu0
      %v1958 = vadd.f32 %v1767, %v1957
      %v1959 = vpop.f32.mrb[0].mxu0
      %v1960 = vadd.f32 %v1769, %v1959
      %1961 = vmatprep.mubr.f32.mxu0 0.0
      %1962 = vmatmul.mubr.f32.gmra.mrb[0].mxu0 %v1584
      %v1963 = vpop.f32.mrb[0].mxu0
      %v1964 = vadd.f32 %v1773, %v1963
      %v1965 = vpop.f32.mrb[0].mxu0
      %v1966 = vadd.f32 %v1775, %v1965
      %1967 = vdwg.mxu0
      %vm1968 = vcmask 556032
      %v1969 = vsel %vm1968, %v1846, 0.0
      %v1970 = vadd.f32 %v1844, %v1969
      %1971 = vadd.xlane.f32.xlu0 %v1970
      %v1972 = vpop.xlane.xlu0 %1971
      %v1973 = vsel %vm1968, %v1852, 0.0
      %v1974 = vadd.f32 %v1850, %v1973
      %1975 = vadd.xlane.f32.xlu0 %v1974
      %v1976 = vpop.xlane.xlu0 %1975
      %v1977 = vsel %vm1968, %v1858, 0.0
      %v1978 = vadd.f32 %v1856, %v1977
      %1979 = vadd.xlane.f32.xlu0 %v1978
      %v1980 = vpop.xlane.xlu0 %1979
      %v1981 = vsel %vm1968, %v1864, 0.0
      %v1982 = vadd.f32 %v1862, %v1981
      %1983 = vadd.xlane.f32.xlu0 %v1982
      %v1984 = vpop.xlane.xlu0 %1983
      %v1985 = vsel %vm1968, %v1870, 0.0
      %v1986 = vadd.f32 %v1868, %v1985
      %1987 = vadd.xlane.f32.xlu0 %v1986
      %v1988 = vpop.xlane.xlu0 %1987
      %v1989 = vsel %vm1968, %v1876, 0.0
      %v1990 = vadd.f32 %v1874, %v1989
      %1991 = vadd.xlane.f32.xlu0 %v1990
      %v1992 = vpop.xlane.xlu0 %1991
      %v1993 = vsel %vm1968, %v1882, 0.0
      %v1994 = vadd.f32 %v1880, %v1993
      %1995 = vadd.xlane.f32.xlu0 %v1994
      %v1996 = vpop.xlane.xlu0 %1995
      %v1997 = vsel %vm1968, %v1888, 0.0
      %v1998 = vadd.f32 %v1886, %v1997
      %1999 = vadd.xlane.f32.xlu0 %v1998
      %v2000 = vpop.xlane.xlu0 %1999
      %v2001 = vsel %vm1968, %v1894, 0.0
      %v2002 = vadd.f32 %v1892, %v2001
      %2003 = vadd.xlane.f32.xlu0 %v2002
      %v2004 = vpop.xlane.xlu0 %2003
      %v2005 = vsel %vm1968, %v1900, 0.0
      %v2006 = vadd.f32 %v1898, %v2005
      %2007 = vadd.xlane.f32.xlu0 %v2006
      %v2008 = vpop.xlane.xlu0 %2007
      %v2009 = vsel %vm1968, %v1906, 0.0
      %v2010 = vadd.f32 %v1904, %v2009
      %2011 = vadd.xlane.f32.xlu0 %v2010
      %v2012 = vpop.xlane.xlu0 %2011
      %v2013 = vsel %vm1968, %v1912, 0.0
      %v2014 = vadd.f32 %v1910, %v2013
      %2015 = vadd.xlane.f32.xlu0 %v2014
      %v2016 = vpop.xlane.xlu0 %2015
      %v2017 = vsel %vm1968, %v1918, 0.0
      %v2018 = vadd.f32 %v1916, %v2017
      %2019 = vadd.xlane.f32.xlu0 %v2018
      %v2020 = vpop.xlane.xlu0 %2019
      %v2021 = vsel %vm1968, %v1924, 0.0
      %v2022 = vadd.f32 %v1922, %v2021
      %2023 = vadd.xlane.f32.xlu0 %v2022
      %v2024 = vpop.xlane.xlu0 %2023
      %v2025 = vsel %vm1968, %v1930, 0.0
      %v2026 = vadd.f32 %v1928, %v2025
      %2027 = vadd.xlane.f32.xlu0 %v2026
      %v2028 = vpop.xlane.xlu0 %2027
      %v2029 = vsel %vm1968, %v1936, 0.0
      %v2030 = vadd.f32 %v1934, %v2029
      %2031 = vadd.xlane.f32.xlu0 %v2030
      %v2032 = vpop.xlane.xlu0 %2031
      %v2033 = vsel %vm1968, %v1942, 0.0
      %v2034 = vadd.f32 %v1940, %v2033
      %2035 = vadd.xlane.f32.xlu0 %v2034
      %v2036 = vpop.xlane.xlu0 %2035
      %v2037 = vsel %vm1968, %v1948, 0.0
      %v2038 = vadd.f32 %v1946, %v2037
      %2039 = vadd.xlane.f32.xlu0 %v2038
      %v2040 = vpop.xlane.xlu0 %2039
      %v2041 = vsel %vm1968, %v1954, 0.0
      %v2042 = vadd.f32 %v1952, %v2041
      %2043 = vadd.xlane.f32.xlu0 %v2042
      %v2044 = vpop.xlane.xlu0 %2043
      %v2045 = vsel %vm1968, %v1960, 0.0
      %v2046 = vadd.f32 %v1958, %v2045
      %2047 = vadd.xlane.f32.xlu0 %v2046
      %v2048 = vpop.xlane.xlu0 %2047
      %v2049 = vsel %vm1968, %v1966, 0.0
      %v2050 = vadd.f32 %v1964, %v2049
      %2051 = vadd.xlane.f32.xlu0 %v2050
      %v2052 = vpop.xlane.xlu0 %2051
      %v2053 = vmul.f32 %v1844, %v1844
      %v2054 = vmul.f32 %v1846, %v1846
      %v2055 = vmul.f32 %v1850, %v1850
      %v2056 = vmul.f32 %v1852, %v1852
      %v2057 = vmul.f32 %v1856, %v1856
      %v2058 = vmul.f32 %v1858, %v1858
      %v2059 = vmul.f32 %v1862, %v1862
      %v2060 = vmul.f32 %v1864, %v1864
      %v2061 = vmul.f32 %v1868, %v1868
      %v2062 = vmul.f32 %v1870, %v1870
      %v2063 = vmul.f32 %v1874, %v1874
      %v2064 = vmul.f32 %v1876, %v1876
      %v2065 = vmul.f32 %v1880, %v1880
      %v2066 = vmul.f32 %v1882, %v1882
      %v2067 = vmul.f32 %v1886, %v1886
      %v2068 = vmul.f32 %v1888, %v1888
      %v2069 = vmul.f32 %v1892, %v1892
      %v2070 = vmul.f32 %v1894, %v1894
      %v2071 = vmul.f32 %v1898, %v1898
      %v2072 = vmul.f32 %v1900, %v1900
      %v2073 = vmul.f32 %v1904, %v1904
      %v2074 = vmul.f32 %v1906, %v1906
      %v2075 = vmul.f32 %v1910, %v1910
      %v2076 = vmul.f32 %v1912, %v1912
      %v2077 = vmul.f32 %v1916, %v1916
      %v2078 = vmul.f32 %v1918, %v1918
      %v2079 = vmul.f32 %v1922, %v1922
      %v2080 = vmul.f32 %v1924, %v1924
      %v2081 = vmul.f32 %v1928, %v1928
      %v2082 = vmul.f32 %v1930, %v1930
      %v2083 = vmul.f32 %v1934, %v1934
      %v2084 = vmul.f32 %v1936, %v1936
      %v2085 = vmul.f32 %v1940, %v1940
      %v2086 = vmul.f32 %v1942, %v1942
      %v2087 = vmul.f32 %v1946, %v1946
      %v2088 = vmul.f32 %v1948, %v1948
      %v2089 = vmul.f32 %v1952, %v1952
      %v2090 = vmul.f32 %v1954, %v1954
      %v2091 = vmul.f32 %v1958, %v1958
      %v2092 = vmul.f32 %v1960, %v1960
      %v2093 = vmul.f32 %v1964, %v1964
      %v2094 = vmul.f32 %v1966, %v1966
      %v2095 = vsel %vm1968, %v2054, 0.0
      %v2096 = vadd.f32 %v2053, %v2095
      %2097 = vadd.xlane.f32.xlu0 %v2096
      %v2098 = vpop.xlane.xlu0 %2097
      %v2099 = vsel %vm1968, %v2056, 0.0
      %v2100 = vadd.f32 %v2055, %v2099
      %2101 = vadd.xlane.f32.xlu0 %v2100
      %v2102 = vpop.xlane.xlu0 %2101
      %v2103 = vsel %vm1968, %v2058, 0.0
      %v2104 = vadd.f32 %v2057, %v2103
      %2105 = vadd.xlane.f32.xlu0 %v2104
      %v2106 = vpop.xlane.xlu0 %2105
      %v2107 = vsel %vm1968, %v2060, 0.0
      %v2108 = vadd.f32 %v2059, %v2107
      %2109 = vadd.xlane.f32.xlu0 %v2108
      %v2110 = vpop.xlane.xlu0 %2109
      %v2111 = vsel %vm1968, %v2062, 0.0
      %v2112 = vadd.f32 %v2061, %v2111
      %2113 = vadd.xlane.f32.xlu0 %v2112
      %v2114 = vpop.xlane.xlu0 %2113
      %v2115 = vsel %vm1968, %v2064, 0.0
      %v2116 = vadd.f32 %v2063, %v2115
      %2117 = vadd.xlane.f32.xlu0 %v2116
      %v2118 = vpop.xlane.xlu0 %2117
      %v2119 = vsel %vm1968, %v2066, 0.0
      %v2120 = vadd.f32 %v2065, %v2119
      %2121 = vadd.xlane.f32.xlu0 %v2120
      %v2122 = vpop.xlane.xlu0 %2121
      %v2123 = vsel %vm1968, %v2068, 0.0
      %v2124 = vadd.f32 %v2067, %v2123
      %2125 = vadd.xlane.f32.xlu0 %v2124
      %v2126 = vpop.xlane.xlu0 %2125
      %v2127 = vsel %vm1968, %v2070, 0.0
      %v2128 = vadd.f32 %v2069, %v2127
      %2129 = vadd.xlane.f32.xlu0 %v2128
      %v2130 = vpop.xlane.xlu0 %2129
      %v2131 = vsel %vm1968, %v2072, 0.0
      %v2132 = vadd.f32 %v2071, %v2131
      %2133 = vadd.xlane.f32.xlu0 %v2132
      %v2134 = vpop.xlane.xlu0 %2133
      %v2135 = vsel %vm1968, %v2074, 0.0
      %v2136 = vadd.f32 %v2073, %v2135
      %2137 = vadd.xlane.f32.xlu0 %v2136
      %v2138 = vpop.xlane.xlu0 %2137
      %v2139 = vsel %vm1968, %v2076, 0.0
      %v2140 = vadd.f32 %v2075, %v2139
      %2141 = vadd.xlane.f32.xlu0 %v2140
      %v2142 = vpop.xlane.xlu0 %2141
      %v2143 = vsel %vm1968, %v2078, 0.0
      %v2144 = vadd.f32 %v2077, %v2143
      %2145 = vadd.xlane.f32.xlu0 %v2144
      %v2146 = vpop.xlane.xlu0 %2145
      %v2147 = vsel %vm1968, %v2080, 0.0
      %v2148 = vadd.f32 %v2079, %v2147
      %2149 = vadd.xlane.f32.xlu0 %v2148
      %v2150 = vpop.xlane.xlu0 %2149
      %v2151 = vsel %vm1968, %v2082, 0.0
      %v2152 = vadd.f32 %v2081, %v2151
      %2153 = vadd.xlane.f32.xlu0 %v2152
      %v2154 = vpop.xlane.xlu0 %2153
      %v2155 = vsel %vm1968, %v2084, 0.0
      %v2156 = vadd.f32 %v2083, %v2155
      %2157 = vadd.xlane.f32.xlu0 %v2156
      %v2158 = vpop.xlane.xlu0 %2157
      %v2159 = vsel %vm1968, %v2086, 0.0
      %v2160 = vadd.f32 %v2085, %v2159
      %2161 = vadd.xlane.f32.xlu0 %v2160
      %v2162 = vpop.xlane.xlu0 %2161
      %v2163 = vsel %vm1968, %v2088, 0.0
      %v2164 = vadd.f32 %v2087, %v2163
      %2165 = vadd.xlane.f32.xlu0 %v2164
      %v2166 = vpop.xlane.xlu0 %2165
      %v2167 = vsel %vm1968, %v2090, 0.0
      %v2168 = vadd.f32 %v2089, %v2167
      %2169 = vadd.xlane.f32.xlu0 %v2168
      %v2170 = vpop.xlane.xlu0 %2169
      %v2171 = vsel %vm1968, %v2092, 0.0
      %v2172 = vadd.f32 %v2091, %v2171
      %2173 = vadd.xlane.f32.xlu0 %v2172
      %v2174 = vpop.xlane.xlu0 %2173
      %v2175 = vsel %vm1968, %v2094, 0.0
      %v2176 = vadd.f32 %v2093, %v2175
      %2177 = vadd.xlane.f32.xlu0 %v2176
      %v2178 = vpop.xlane.xlu0 %2177
      %v2179 = vmul.f32 %v1972, 0.0051020407
      %v2180 = vmul.f32 %v1976, 0.0051020407
      %v2181 = vmul.f32 %v1980, 0.0051020407
      %v2182 = vmul.f32 %v1984, 0.0051020407
      %v2183 = vmul.f32 %v1988, 0.0051020407
      %v2184 = vmul.f32 %v1992, 0.0051020407
      %v2185 = vmul.f32 %v1996, 0.0051020407
      %v2186 = vmul.f32 %v2000, 0.0051020407
      %v2187 = vmul.f32 %v2004, 0.0051020407
      %v2188 = vmul.f32 %v2008, 0.0051020407
      %v2189 = vmul.f32 %v2012, 0.0051020407
      %v2190 = vmul.f32 %v2016, 0.0051020407
      %v2191 = vmul.f32 %v2020, 0.0051020407
      %v2192 = vmul.f32 %v2024, 0.0051020407
      %v2193 = vmul.f32 %v2028, 0.0051020407
      %v2194 = vmul.f32 %v2032, 0.0051020407
      %v2195 = vmul.f32 %v2036, 0.0051020407
      %v2196 = vmul.f32 %v2040, 0.0051020407
      %v2197 = vmul.f32 %v2044, 0.0051020407
      %v2198 = vmul.f32 %v2048, 0.0051020407
      %v2199 = vmul.f32 %v2052, 0.0051020407
      %v2200 = vmul.f32 %v2098, 0.0051020407
      %v2201 = vmul.f32 %v2102, 0.0051020407
      %v2202 = vmul.f32 %v2106, 0.0051020407
      %v2203 = vmul.f32 %v2110, 0.0051020407
      %v2204 = vmul.f32 %v2114, 0.0051020407
      %v2205 = vmul.f32 %v2118, 0.0051020407
      %v2206 = vmul.f32 %v2122, 0.0051020407
      %v2207 = vmul.f32 %v2126, 0.0051020407
      %v2208 = vmul.f32 %v2130, 0.0051020407
      %v2209 = vmul.f32 %v2134, 0.0051020407
      %v2210 = vmul.f32 %v2138, 0.0051020407
      %v2211 = vmul.f32 %v2142, 0.0051020407
      %v2212 = vmul.f32 %v2146, 0.0051020407
      %v2213 = vmul.f32 %v2150, 0.0051020407
      %v2214 = vmul.f32 %v2154, 0.0051020407
      %v2215 = vmul.f32 %v2158, 0.0051020407
      %v2216 = vmul.f32 %v2162, 0.0051020407
      %v2217 = vmul.f32 %v2166, 0.0051020407
      %v2218 = vmul.f32 %v2170, 0.0051020407
      %v2219 = vmul.f32 %v2174, 0.0051020407
      %v2220 = vmul.f32 %v2178, 0.0051020407
      %v2221 = vmul.f32 %v2179, %v2179
      %v2222 = vmul.f32 %v2180, %v2180
      %v2223 = vmul.f32 %v2181, %v2181
      %v2224 = vmul.f32 %v2182, %v2182
      %v2225 = vmul.f32 %v2183, %v2183
      %v2226 = vmul.f32 %v2184, %v2184
      %v2227 = vmul.f32 %v2185, %v2185
      %v2228 = vmul.f32 %v2186, %v2186
      %v2229 = vmul.f32 %v2187, %v2187
      %v2230 = vmul.f32 %v2188, %v2188
      %v2231 = vmul.f32 %v2189, %v2189
      %v2232 = vmul.f32 %v2190, %v2190
      %v2233 = vmul.f32 %v2191, %v2191
      %v2234 = vmul.f32 %v2192, %v2192
      %v2235 = vmul.f32 %v2193, %v2193
      %v2236 = vmul.f32 %v2194, %v2194
      %v2237 = vmul.f32 %v2195, %v2195
      %v2238 = vmul.f32 %v2196, %v2196
      %v2239 = vmul.f32 %v2197, %v2197
      %v2240 = vmul.f32 %v2198, %v2198
      %v2241 = vmul.f32 %v2199, %v2199
      %v2242 = vsub.f32 %v2200, %v2221
      %v2243 = vsub.f32 %v2201, %v2222
      %v2244 = vsub.f32 %v2202, %v2223
      %v2245 = vsub.f32 %v2203, %v2224
      %v2246 = vsub.f32 %v2204, %v2225
      %v2247 = vsub.f32 %v2205, %v2226
      %v2248 = vsub.f32 %v2206, %v2227
      %v2249 = vsub.f32 %v2207, %v2228
      %v2250 = vsub.f32 %v2208, %v2229
      %v2251 = vsub.f32 %v2209, %v2230
      %v2252 = vsub.f32 %v2210, %v2231
      %v2253 = vsub.f32 %v2211, %v2232
      %v2254 = vsub.f32 %v2212, %v2233
      %v2255 = vsub.f32 %v2213, %v2234
      %v2256 = vsub.f32 %v2214, %v2235
      %v2257 = vsub.f32 %v2215, %v2236
      %v2258 = vsub.f32 %v2216, %v2237
      %v2259 = vsub.f32 %v2217, %v2238
      %v2260 = vsub.f32 %v2218, %v2239
      %v2261 = vsub.f32 %v2219, %v2240
      %v2262 = vsub.f32 %v2220, %v2241
      %v2263 = vmax.f32 %v2242, 0.0
      %v2264 = vmax.f32 %v2243, 0.0
      %v2265 = vmax.f32 %v2244, 0.0
      %v2266 = vmax.f32 %v2245, 0.0
      %v2267 = vmax.f32 %v2246, 0.0
      %v2268 = vmax.f32 %v2247, 0.0
      %v2269 = vmax.f32 %v2248, 0.0
      %v2270 = vmax.f32 %v2249, 0.0
      %v2271 = vmax.f32 %v2250, 0.0
      %v2272 = vmax.f32 %v2251, 0.0
      %v2273 = vmax.f32 %v2252, 0.0
      %v2274 = vmax.f32 %v2253, 0.0
      %v2275 = vmax.f32 %v2254, 0.0
      %v2276 = vmax.f32 %v2255, 0.0
      %v2277 = vmax.f32 %v2256, 0.0
      %v2278 = vmax.f32 %v2257, 0.0
      %v2279 = vmax.f32 %v2258, 0.0
      %v2280 = vmax.f32 %v2259, 0.0
      %v2281 = vmax.f32 %v2260, 0.0
      %v2282 = vmax.f32 %v2261, 0.0
      %v2283 = vmax.f32 %v2262, 0.0
      %v2284 = vadd.f32 %v2263, 1e-05
      %v2285 = vadd.f32 %v2264, 1e-05
      %v2286 = vadd.f32 %v2265, 1e-05
      %v2287 = vadd.f32 %v2266, 1e-05
      %v2288 = vadd.f32 %v2267, 1e-05
      %v2289 = vadd.f32 %v2268, 1e-05
      %v2290 = vadd.f32 %v2269, 1e-05
      %v2291 = vadd.f32 %v2270, 1e-05
      %v2292 = vadd.f32 %v2271, 1e-05
      %v2293 = vadd.f32 %v2272, 1e-05
      %v2294 = vadd.f32 %v2273, 1e-05
      %v2295 = vadd.f32 %v2274, 1e-05
      %v2296 = vadd.f32 %v2275, 1e-05
      %v2297 = vadd.f32 %v2276, 1e-05
      %v2298 = vadd.f32 %v2277, 1e-05
      %v2299 = vadd.f32 %v2278, 1e-05
      %v2300 = vadd.f32 %v2279, 1e-05
      %v2301 = vadd.f32 %v2280, 1e-05
      %v2302 = vadd.f32 %v2281, 1e-05
      %v2303 = vadd.f32 %v2282, 1e-05
      %v2304 = vadd.f32 %v2283, 1e-05
      %v2305 = vrsqrt.pop %v2284
      %v2306 = vrsqrt.pop %v2285
      %v2307 = vrsqrt.pop %v2286
      %v2308 = vrsqrt.pop %v2287
      %v2309 = vrsqrt.pop %v2288
      %v2310 = vrsqrt.pop %v2289
      %v2311 = vrsqrt.pop %v2290
      %v2312 = vrsqrt.pop %v2291
      %v2313 = vrsqrt.pop %v2292
      %v2314 = vrsqrt.pop %v2293
      %v2315 = vrsqrt.pop %v2294
      %v2316 = vrsqrt.pop %v2295
      %v2317 = vrsqrt.pop %v2296
      %v2318 = vrsqrt.pop %v2297
      %v2319 = vrsqrt.pop %v2298
      %v2320 = vrsqrt.pop %v2299
      %v2321 = vrsqrt.pop %v2300
      %v2322 = vrsqrt.pop %v2301
      %v2323 = vrsqrt.pop %v2302
      %v2324 = vrsqrt.pop %v2303
      %v2325 = vrsqrt.pop %v2304
      %v2326 = vld [vmem:[%s316] sm:$0xff]
      %v2327 = vld [vmem:[%s316 + $0x8] sm:$0xff]
      %v2328 = vld [vmem:[%s316 + $0x10] sm:$0xff]
      %v2329 = vld [vmem:[%s316 + $0x18] sm:$0xff]
      %v2330 = vld [vmem:[%s316 + $0x20] sm:$0xff]
      %v2331 = vld [vmem:[%s316 + $0x28] sm:$0xff]
      %v2332 = vld [vmem:[%s316 + $0x30] sm:$0xff]
      %v2333 = vld [vmem:[%s316 + $0x38] sm:$0xff]
      %v2334 = vld [vmem:[%s316 + $0x40] sm:$0xff]
      %v2335 = vld [vmem:[%s316 + $0x48] sm:$0xff]
      %v2336 = vld [vmem:[%s316 + $0x50] sm:$0xff]
      %v2337 = vld [vmem:[%s316 + $0x58] sm:$0xff]
      %v2338 = vld [vmem:[%s316 + $0x60] sm:$0xff]
      %v2339 = vld [vmem:[%s316 + $0x68] sm:$0xff]
      %v2340 = vld [vmem:[%s316 + $0x70] sm:$0xff]
      %v2341 = vld [vmem:[%s316 + $0x78] sm:$0xff]
      %v2342 = vld [vmem:[%s316 + $0x80] sm:$0xff]
      %v2343 = vld [vmem:[%s316 + $0x88] sm:$0xff]
      %v2344 = vld [vmem:[%s316 + $0x90] sm:$0xff]
      %v2345 = vld [vmem:[%s316 + $0x98] sm:$0xff]
      %v2346 = vld [vmem:[%s316 + $0xa0] sm:$0xff]
      %v2347 = vmul.f32 %v2326, %v2305
      %v2348 = vmul.f32 %v2327, %v2306
      %v2349 = vmul.f32 %v2328, %v2307
      %v2350 = vmul.f32 %v2329, %v2308
      %v2351 = vmul.f32 %v2330, %v2309
      %v2352 = vmul.f32 %v2331, %v2310
      %v2353 = vmul.f32 %v2332, %v2311
      %v2354 = vmul.f32 %v2333, %v2312
      %v2355 = vmul.f32 %v2334, %v2313
      %v2356 = vmul.f32 %v2335, %v2314
      %v2357 = vmul.f32 %v2336, %v2315
      %v2358 = vmul.f32 %v2337, %v2316
      %v2359 = vmul.f32 %v2338, %v2317
      %v2360 = vmul.f32 %v2339, %v2318
      %v2361 = vmul.f32 %v2340, %v2319
      %v2362 = vmul.f32 %v2341, %v2320
      %v2363 = vmul.f32 %v2342, %v2321
      %v2364 = vmul.f32 %v2343, %v2322
      %v2365 = vmul.f32 %v2344, %v2323
      %v2366 = vmul.f32 %v2345, %v2324
      %v2367 = vmul.f32 %v2346, %v2325
      %v2368 = vld [vmem:[%s322] sm:$0xff]
      %v2369 = vld [vmem:[%s322 + $0x8] sm:$0xff]
      %v2370 = vld [vmem:[%s322 + $0x10] sm:$0xff]
      %v2371 = vld [vmem:[%s322 + $0x18] sm:$0xff]
      %v2372 = vld [vmem:[%s322 + $0x20] sm:$0xff]
      %v2373 = vld [vmem:[%s322 + $0x28] sm:$0xff]
      %v2374 = vld [vmem:[%s322 + $0x30] sm:$0xff]
      %v2375 = vld [vmem:[%s322 + $0x38] sm:$0xff]
      %v2376 = vld [vmem:[%s322 + $0x40] sm:$0xff]
      %v2377 = vld [vmem:[%s322 + $0x48] sm:$0xff]
      %v2378 = vld [vmem:[%s322 + $0x50] sm:$0xff]
      %v2379 = vld [vmem:[%s322 + $0x58] sm:$0xff]
      %v2380 = vld [vmem:[%s322 + $0x60] sm:$0xff]
      %v2381 = vld [vmem:[%s322 + $0x68] sm:$0xff]
      %v2382 = vld [vmem:[%s322 + $0x70] sm:$0xff]
      %v2383 = vld [vmem:[%s322 + $0x78] sm:$0xff]
      %v2384 = vld [vmem:[%s322 + $0x80] sm:$0xff]
      %v2385 = vld [vmem:[%s322 + $0x88] sm:$0xff]
      %v2386 = vld [vmem:[%s322 + $0x90] sm:$0xff]
      %v2387 = vld [vmem:[%s322 + $0x98] sm:$0xff]
      %v2388 = vld [vmem:[%s322 + $0xa0] sm:$0xff]
      %v2389 = vmul.f32 %v2179, %v2347
      %v2390 = vmul.f32 %v2180, %v2348
      %v2391 = vmul.f32 %v2181, %v2349
      %v2392 = vmul.f32 %v2182, %v2350
      %v2393 = vmul.f32 %v2183, %v2351
      %v2394 = vmul.f32 %v2184, %v2352
      %v2395 = vmul.f32 %v2185, %v2353
      %v2396 = vmul.f32 %v2186, %v2354
      %v2397 = vmul.f32 %v2187, %v2355
      %v2398 = vmul.f32 %v2188, %v2356
      %v2399 = vmul.f32 %v2189, %v2357
      %v2400 = vmul.f32 %v2190, %v2358
      %v2401 = vmul.f32 %v2191, %v2359
      %v2402 = vmul.f32 %v2192, %v2360
      %v2403 = vmul.f32 %v2193, %v2361
      %v2404 = vmul.f32 %v2194, %v2362
      %v2405 = vmul.f32 %v2195, %v2363
      %v2406 = vmul.f32 %v2196, %v2364
      %v2407 = vmul.f32 %v2197, %v2365
      %v2408 = vmul.f32 %v2198, %v2366
      %v2409 = vmul.f32 %v2199, %v2367
      %v2410 = vsub.f32 %v2368, %v2389
      %v2411 = vsub.f32 %v2369, %v2390
      %v2412 = vsub.f32 %v2370, %v2391
      %v2413 = vsub.f32 %v2371, %v2392
      %v2414 = vsub.f32 %v2372, %v2393
      %v2415 = vsub.f32 %v2373, %v2394
      %v2416 = vsub.f32 %v2374, %v2395
      %v2417 = vsub.f32 %v2375, %v2396
      %v2418 = vsub.f32 %v2376, %v2397
      %v2419 = vsub.f32 %v2377, %v2398
      %v2420 = vsub.f32 %v2378, %v2399
      %v2421 = vsub.f32 %v2379, %v2400
      %v2422 = vsub.f32 %v2380, %v2401
      %v2423 = vsub.f32 %v2381, %v2402
      %v2424 = vsub.f32 %v2382, %v2403
      %v2425 = vsub.f32 %v2383, %v2404
      %v2426 = vsub.f32 %v2384, %v2405
      %v2427 = vsub.f32 %v2385, %v2406
      %v2428 = vsub.f32 %v2386, %v2407
      %v2429 = vsub.f32 %v2387, %v2408
      %v2430 = vsub.f32 %v2388, %v2409
      %2432 = vset.pattern.permute.xlu0 0
      %2433 = vperm.xlu0 %2432, %v2347
      %v2434 = vpop.permute.xlu0 %2433
      %2437 = vset.pattern.permute.xlu0 0
      %2438 = vperm.xlu0 %2437, %v2348
      %v2439 = vpop.permute.xlu0 %2438
      %2442 = vset.pattern.permute.xlu0 0
      %2443 = vperm.xlu0 %2442, %v2349
      %v2444 = vpop.permute.xlu0 %2443
      %2447 = vset.pattern.permute.xlu0 0
      %2448 = vperm.xlu0 %2447, %v2350
      %v2449 = vpop.permute.xlu0 %2448
      %2452 = vset.pattern.permute.xlu0 0
      %2453 = vperm.xlu0 %2452, %v2351
      %v2454 = vpop.permute.xlu0 %2453
      %2457 = vset.pattern.permute.xlu0 0
      %2458 = vperm.xlu0 %2457, %v2352
      %v2459 = vpop.permute.xlu0 %2458
      %2462 = vset.pattern.permute.xlu0 0
      %2463 = vperm.xlu0 %2462, %v2353
      %v2464 = vpop.permute.xlu0 %2463
      %2467 = vset.pattern.permute.xlu0 0
      %2468 = vperm.xlu0 %2467, %v2354
      %v2469 = vpop.permute.xlu0 %2468
      %2472 = vset.pattern.permute.xlu0 0
      %2473 = vperm.xlu0 %2472, %v2355
      %v2474 = vpop.permute.xlu0 %2473
      %2477 = vset.pattern.permute.xlu0 0
      %2478 = vperm.xlu0 %2477, %v2356
      %v2479 = vpop.permute.xlu0 %2478
      %2482 = vset.pattern.permute.xlu0 0
      %2483 = vperm.xlu0 %2482, %v2357
      %v2484 = vpop.permute.xlu0 %2483
      %2487 = vset.pattern.permute.xlu0 0
      %2488 = vperm.xlu0 %2487, %v2358
      %v2489 = vpop.permute.xlu0 %2488
      %2492 = vset.pattern.permute.xlu0 0
      %2493 = vperm.xlu0 %2492, %v2359
      %v2494 = vpop.permute.xlu0 %2493
      %2497 = vset.pattern.permute.xlu0 0
      %2498 = vperm.xlu0 %2497, %v2360
      %v2499 = vpop.permute.xlu0 %2498
      %2502 = vset.pattern.permute.xlu0 0
      %2503 = vperm.xlu0 %2502, %v2361
      %v2504 = vpop.permute.xlu0 %2503
      %2507 = vset.pattern.permute.xlu0 0
      %2508 = vperm.xlu0 %2507, %v2362
      %v2509 = vpop.permute.xlu0 %2508
      %2512 = vset.pattern.permute.xlu0 0
      %2513 = vperm.xlu0 %2512, %v2363
      %v2514 = vpop.permute.xlu0 %2513
      %2517 = vset.pattern.permute.xlu0 0
      %2518 = vperm.xlu0 %2517, %v2364
      %v2519 = vpop.permute.xlu0 %2518
      %2522 = vset.pattern.permute.xlu0 0
      %2523 = vperm.xlu0 %2522, %v2365
      %v2524 = vpop.permute.xlu0 %2523
      %2527 = vset.pattern.permute.xlu0 0
      %2528 = vperm.xlu0 %2527, %v2366
      %v2529 = vpop.permute.xlu0 %2528
      %2532 = vset.pattern.permute.xlu0 0
      %2533 = vperm.xlu0 %2532, %v2367
      %v2534 = vpop.permute.xlu0 %2533
      %v2536 = vmul.f32 %v1844, %v2434
      %v2537 = vmul.f32 %v1846, %v2434
      %v2538 = vmul.f32 %v1850, %v2439
      %v2539 = vmul.f32 %v1852, %v2439
      %v2540 = vmul.f32 %v1856, %v2444
      %v2541 = vmul.f32 %v1858, %v2444
      %v2542 = vmul.f32 %v1862, %v2449
      %v2543 = vmul.f32 %v1864, %v2449
      %v2544 = vmul.f32 %v1868, %v2454
      %v2545 = vmul.f32 %v1870, %v2454
      %v2546 = vmul.f32 %v1874, %v2459
      %v2547 = vmul.f32 %v1876, %v2459
      %v2548 = vmul.f32 %v1880, %v2464
      %v2549 = vmul.f32 %v1882, %v2464
      %v2550 = vmul.f32 %v1886, %v2469
      %v2551 = vmul.f32 %v1888, %v2469
      %v2552 = vmul.f32 %v1892, %v2474
      %v2553 = vmul.f32 %v1894, %v2474
      %v2554 = vmul.f32 %v1898, %v2479
      %v2555 = vmul.f32 %v1900, %v2479
      %v2556 = vmul.f32 %v1904, %v2484
      %v2557 = vmul.f32 %v1906, %v2484
      %v2558 = vmul.f32 %v1910, %v2489
      %v2559 = vmul.f32 %v1912, %v2489
      %v2560 = vmul.f32 %v1916, %v2494
      %v2561 = vmul.f32 %v1918, %v2494
      %v2562 = vmul.f32 %v1922, %v2499
      %v2563 = vmul.f32 %v1924, %v2499
      %v2564 = vmul.f32 %v1928, %v2504
      %v2565 = vmul.f32 %v1930, %v2504
      %v2566 = vmul.f32 %v1934, %v2509
      %v2567 = vmul.f32 %v1936, %v2509
      %v2568 = vmul.f32 %v1940, %v2514
      %v2569 = vmul.f32 %v1942, %v2514
      %v2570 = vmul.f32 %v1946, %v2519
      %v2571 = vmul.f32 %v1948, %v2519
      %v2572 = vmul.f32 %v1952, %v2524
      %v2573 = vmul.f32 %v1954, %v2524
      %v2574 = vmul.f32 %v1958, %v2529
      %v2575 = vmul.f32 %v1960, %v2529
      %v2576 = vmul.f32 %v1964, %v2534
      %v2577 = vmul.f32 %v1966, %v2534
      %2579 = vset.pattern.permute.xlu0 0
      %2580 = vperm.xlu0 %2579, %v2410
      %v2581 = vpop.permute.xlu0 %2580
      %2584 = vset.pattern.permute.xlu0 0
      %2585 = vperm.xlu0 %2584, %v2411
      %v2586 = vpop.permute.xlu0 %2585
      %2589 = vset.pattern.permute.xlu0 0
      %2590 = vperm.xlu0 %2589, %v2412
      %v2591 = vpop.permute.xlu0 %2590
      %2594 = vset.pattern.permute.xlu0 0
      %2595 = vperm.xlu0 %2594, %v2413
      %v2596 = vpop.permute.xlu0 %2595
      %2599 = vset.pattern.permute.xlu0 0
      %2600 = vperm.xlu0 %2599, %v2414
      %v2601 = vpop.permute.xlu0 %2600
      %2604 = vset.pattern.permute.xlu0 0
      %2605 = vperm.xlu0 %2604, %v2415
      %v2606 = vpop.permute.xlu0 %2605
      %2609 = vset.pattern.permute.xlu0 0
      %2610 = vperm.xlu0 %2609, %v2416
      %v2611 = vpop.permute.xlu0 %2610
      %2614 = vset.pattern.permute.xlu0 0
      %2615 = vperm.xlu0 %2614, %v2417
      %v2616 = vpop.permute.xlu0 %2615
      %2619 = vset.pattern.permute.xlu0 0
      %2620 = vperm.xlu0 %2619, %v2418
      %v2621 = vpop.permute.xlu0 %2620
      %2624 = vset.pattern.permute.xlu0 0
      %2625 = vperm.xlu0 %2624, %v2419
      %v2626 = vpop.permute.xlu0 %2625
      %2629 = vset.pattern.permute.xlu0 0
      %2630 = vperm.xlu0 %2629, %v2420
      %v2631 = vpop.permute.xlu0 %2630
      %2634 = vset.pattern.permute.xlu0 0
      %2635 = vperm.xlu0 %2634, %v2421
      %v2636 = vpop.permute.xlu0 %2635
      %2639 = vset.pattern.permute.xlu0 0
      %2640 = vperm.xlu0 %2639, %v2422
      %v2641 = vpop.permute.xlu0 %2640
      %2644 = vset.pattern.permute.xlu0 0
      %2645 = vperm.xlu0 %2644, %v2423
      %v2646 = vpop.permute.xlu0 %2645
      %2649 = vset.pattern.permute.xlu0 0
      %2650 = vperm.xlu0 %2649, %v2424
      %v2651 = vpop.permute.xlu0 %2650
      %2654 = vset.pattern.permute.xlu0 0
      %2655 = vperm.xlu0 %2654, %v2425
      %v2656 = vpop.permute.xlu0 %2655
      %2659 = vset.pattern.permute.xlu0 0
      %2660 = vperm.xlu0 %2659, %v2426
      %v2661 = vpop.permute.xlu0 %2660
      %2664 = vset.pattern.permute.xlu0 0
      %2665 = vperm.xlu0 %2664, %v2427
      %v2666 = vpop.permute.xlu0 %2665
      %2669 = vset.pattern.permute.xlu0 0
      %2670 = vperm.xlu0 %2669, %v2428
      %v2671 = vpop.permute.xlu0 %2670
      %2674 = vset.pattern.permute.xlu0 0
      %2675 = vperm.xlu0 %2674, %v2429
      %v2676 = vpop.permute.xlu0 %2675
      %2679 = vset.pattern.permute.xlu0 0
      %2680 = vperm.xlu0 %2679, %v2430
      %v2681 = vpop.permute.xlu0 %2680
      %v2683 = vadd.f32 %v2536, %v2581
      %v2684 = vadd.f32 %v2537, %v2581
      %v2685 = vadd.f32 %v2538, %v2586
      %v2686 = vadd.f32 %v2539, %v2586
      %v2687 = vadd.f32 %v2540, %v2591
      %v2688 = vadd.f32 %v2541, %v2591
      %v2689 = vadd.f32 %v2542, %v2596
      %v2690 = vadd.f32 %v2543, %v2596
      %v2691 = vadd.f32 %v2544, %v2601
      %v2692 = vadd.f32 %v2545, %v2601
      %v2693 = vadd.f32 %v2546, %v2606
      %v2694 = vadd.f32 %v2547, %v2606
      %v2695 = vadd.f32 %v2548, %v2611
      %v2696 = vadd.f32 %v2549, %v2611
      %v2697 = vadd.f32 %v2550, %v2616
      %v2698 = vadd.f32 %v2551, %v2616
      %v2699 = vadd.f32 %v2552, %v2621
      %v2700 = vadd.f32 %v2553, %v2621
      %v2701 = vadd.f32 %v2554, %v2626
      %v2702 = vadd.f32 %v2555, %v2626
      %v2703 = vadd.f32 %v2556, %v2631
      %v2704 = vadd.f32 %v2557, %v2631
      %v2705 = vadd.f32 %v2558, %v2636
      %v2706 = vadd.f32 %v2559, %v2636
      %v2707 = vadd.f32 %v2560, %v2641
      %v2708 = vadd.f32 %v2561, %v2641
      %v2709 = vadd.f32 %v2562, %v2646
      %v2710 = vadd.f32 %v2563, %v2646
      %v2711 = vadd.f32 %v2564, %v2651
      %v2712 = vadd.f32 %v2565, %v2651
      %v2713 = vadd.f32 %v2566, %v2656
      %v2714 = vadd.f32 %v2567, %v2656
      %v2715 = vadd.f32 %v2568, %v2661
      %v2716 = vadd.f32 %v2569, %v2661
      %v2717 = vadd.f32 %v2570, %v2666
      %v2718 = vadd.f32 %v2571, %v2666
      %v2719 = vadd.f32 %v2572, %v2671
      %v2720 = vadd.f32 %v2573, %v2671
      %v2721 = vadd.f32 %v2574, %v2676
      %v2722 = vadd.f32 %v2575, %v2676
      %v2723 = vadd.f32 %v2576, %v2681
      %v2724 = vadd.f32 %v2577, %v2681
      %2725 = vst [vmem:[%s329] sm:$0xff] %v2683
      %2726 = vst.msk [vmem:[%s329 + $0x8] sm:$0xff] %vm1968, %v2684
      %2727 = vst [vmem:[%s329 + $0x10] sm:$0xff] %v2685
      %2728 = vst.msk [vmem:[%s329 + $0x18] sm:$0xff] %vm1968, %v2686
      %2729 = vst [vmem:[%s329 + $0x20] sm:$0xff] %v2687
      %2730 = vst.msk [vmem:[%s329 + $0x28] sm:$0xff] %vm1968, %v2688
      %2731 = vst [vmem:[%s329 + $0x30] sm:$0xff] %v2689
      %2732 = vst.msk [vmem:[%s329 + $0x38] sm:$0xff] %vm1968, %v2690
      %2733 = vst [vmem:[%s329 + $0x40] sm:$0xff] %v2691
      %2734 = vst.msk [vmem:[%s329 + $0x48] sm:$0xff] %vm1968, %v2692
      %2735 = vst [vmem:[%s329 + $0x50] sm:$0xff] %v2693
      %2736 = vst.msk [vmem:[%s329 + $0x58] sm:$0xff] %vm1968, %v2694
      %2737 = vst [vmem:[%s329 + $0x60] sm:$0xff] %v2695
      %2738 = vst.msk [vmem:[%s329 + $0x68] sm:$0xff] %vm1968, %v2696
      %2739 = vst [vmem:[%s329 + $0x70] sm:$0xff] %v2697
      %2740 = vst.msk [vmem:[%s329 + $0x78] sm:$0xff] %vm1968, %v2698
      %2741 = vst [vmem:[%s329 + $0x80] sm:$0xff] %v2699
      %2742 = vst.msk [vmem:[%s329 + $0x88] sm:$0xff] %vm1968, %v2700
      %2743 = vst [vmem:[%s329 + $0x90] sm:$0xff] %v2701
      %2744 = vst.msk [vmem:[%s329 + $0x98] sm:$0xff] %vm1968, %v2702
      %2745 = vst [vmem:[%s329 + $0xa0] sm:$0xff] %v2703
      %2746 = vst.msk [vmem:[%s329 + $0xa8] sm:$0xff] %vm1968, %v2704
      %2747 = vst [vmem:[%s329 + $0xb0] sm:$0xff] %v2705
      %2748 = vst.msk [vmem:[%s329 + $0xb8] sm:$0xff] %vm1968, %v2706
      %2749 = vst [vmem:[%s329 + $0xc0] sm:$0xff] %v2707
      %2750 = vst.msk [vmem:[%s329 + $0xc8] sm:$0xff] %vm1968, %v2708
      %2751 = vst [vmem:[%s329 + $0xd0] sm:$0xff] %v2709
      %2752 = vst.msk [vmem:[%s329 + $0xd8] sm:$0xff] %vm1968, %v2710
      %2753 = vst [vmem:[%s329 + $0xe0] sm:$0xff] %v2711
      %2754 = vst.msk [vmem:[%s329 + $0xe8] sm:$0xff] %vm1968, %v2712
      %2755 = vst [vmem:[%s329 + $0xf0] sm:$0xff] %v2713
      %2756 = vst.msk [vmem:[%s329 + $0xf8] sm:$0xff] %vm1968, %v2714
      %2757 = vst [vmem:[%s329 + $0x100] sm:$0xff] %v2715
      %2758 = vst.msk [vmem:[%s329 + $0x108] sm:$0xff] %vm1968, %v2716
      %2759 = vst [vmem:[%s329 + $0x110] sm:$0xff] %v2717
      %2760 = vst.msk [vmem:[%s329 + $0x118] sm:$0xff] %vm1968, %v2718
      %2761 = vst [vmem:[%s329 + $0x120] sm:$0xff] %v2719
      %2762 = vst.msk [vmem:[%s329 + $0x128] sm:$0xff] %vm1968, %v2720
      %2763 = vst [vmem:[%s329 + $0x130] sm:$0xff] %v2721
      %2764 = vst.msk [vmem:[%s329 + $0x138] sm:$0xff] %vm1968, %v2722
      %2765 = vst [vmem:[%s329 + $0x140] sm:$0xff] %v2723
      %2766 = vst.msk [vmem:[%s329 + $0x148] sm:$0xff] %vm1968, %v2724
      %s2767 = smul.u32 21, %s18
      %p2768 = scmp.lt.s32.totalorder %s2767, 41
      %s2769 = scalar_select %p2768, %s2767, 41
      %s2770 = smul.addr %s2769, 2
      %s2771 = smul.addr %s2770, 8
      %s2772 = scalar_lea.vmem %s7, %s2771
      // Predicated region
      $region49: #{tpu_custom_call.1} parent=47 // pred_check
        %p2773 = pneg %p198
      $region50: #{tpu_custom_call.1} parent=47 // pred_check_branch
        %2775 = sbr.rel (%p2773) target = $region52
      $region51: #{tpu_custom_call.1} parent=47 // pred_region
        %s2776 = smul.u32 21, %s18
      $region52: #{tpu_custom_call.1} parent=47 // pred_fallthru
        _
    $region48: #{tpu_custom_call.1} parent=5 // pred_fallthru
      _
    %p2777 = scmp.le.s32.totalorder 2, %s13
    // Predicated region
    $region53: #{tpu_custom_call.1} parent=5 // pred_check
      %p2778 = pneg %p2777
    $region54: #{tpu_custom_call.1} parent=5 // pred_check_branch
      %2780 = sbr.rel (%p2778) target = $region56
    $region55: #{tpu_custom_call.1} parent=5 // pred_region
      %s2781 = ssub.s32 %s13, 2
      // Predicated region
      $region57: #{tpu_custom_call.1} parent=55 // pred_check
        %p2782 = pneg %p204
      $region58: #{tpu_custom_call.1} parent=55 // pred_check_branch
        %2784 = sbr.rel (%p2782) target = $region60
      $region59: #{tpu_custom_call.1} parent=55 // pred_region
        %s2785 = smul.u32 21, %s19
        %p2786 = scmp.lt.s32.totalorder %s2785, 41
        %s2787 = scalar_select %p2786, %s2785, 41
        %s2788 = smul.addr %s2787, 2
        %s2789 = smul.addr %s2788, 8
        %s2790 = scalar_lea.vmem %s7, %s2789
      $region60: #{tpu_custom_call.1} parent=55 // pred_fallthru
        _
    $region56: #{tpu_custom_call.1} parent=5 // pred_fallthru
      _
  $region6: #{tpu_custom_call.1} parent=0 // loop_footer
    %s17 = sadd.s32 1, %s13
  $region7: #{tpu_custom_call.1} parent=0 // loop_footer_branch
    %12 = sbr.rel target = $region3
  $region8: #{tpu_custom_call.1} parent=0 // loop_exit
    _

</llo_original>
